<compile_context>
chip_gen: v6e
topology: v6e:2x2x1
jax: 0.10.0
libtpu: 0.0.40
codegen_flags: <defaults>
</compile_context>

<pallas_src>
import math
import functools

import numpy as np
import jax
import jax.numpy as jnp
from jax.experimental import pallas as pl
from jax.experimental.pallas import tpu as pltpu

# ---------------- config (cfg.*) ----------------
D_MODEL = 32
NHEAD = 4
HEAD_DIM = D_MODEL // NHEAD
DIM_FF = 4 * D_MODEL           # cfg.transformer_dim_feedforward or d_model*4
NUM_LAYERS = 2
NUM_CLASSES = 8
SEQ = 8
BATCH = 2
LN_EPS = 1e-5

G_X = BATCH * SEQ              # 16 un-replicated residual rows (b, s)
G_Q = BATCH * NHEAD * SEQ      # 64 per-(batch, head) replicated query rows (b, h, s)
BH = BATCH * NHEAD             # 8 token-0 query rows (b, h)

# ---- packed weight slab layout (per layer: rows = D_MODEL, lanes = W_COLS) ----
W_QKV = 0                      # (32, 96)  [Wq*scale | Wk | Wv]
W_O = W_QKV + 3 * D_MODEL      # (32, 32)  out_proj.weight.T
W_1 = 128                      # (32, 128) linear1.weight.T
W_2T = W_1 + DIM_FF            # (32, 128) linear2.weight (contracted on last dim)
W_CLS = W_2T + DIM_FF          # (32, 8)   classifier.weight.T  (layer 0 slot only)
W_COLS = 512                   # padded lane-dense

# ---- packed bias / norm slab layout (per layer: rows = 1, lanes = B_COLS) ----
B_QKV = 0                      # 96
B_O = 96                       # 32
B_N1W, B_N1B, B_N2W, B_N2B = 128, 160, 192, 224
B_1 = 256                      # 128
B_2 = 384                      # 32
B_CLS = 416                    # 8   (layer 0 slot only)
B_COLS = 512

# ---- packed constants slab row layout (lanes = 128) ----
C_REP = 0                      # (64, 16) q row replicator: (b,h,s) <- (b,s)
C_HM = C_REP + G_Q             # (64, 32) per-head 0/1 lane mask
C_KM = C_HM + G_Q              # (64, 16) 0/1 same-batch softmax mask
C_RSUM = C_KM + G_Q            # (16, 64) head-sum back onto (b,s) rows
C_SELQ0 = C_RSUM + G_X         # (8, 16)  token-0 q selector / replicator
C_HM0 = C_SELQ0 + BH           # (8, 32)
C_KM0 = C_HM0 + BH             # (8, 16)
C_RSUM0 = C_KM0 + BH           # (2, 8)   head-sum per batch (token 0)
C_SELX0 = C_RSUM0 + 8          # (2, 16)  token-0 residual selector
C_ROWS = C_SELX0 + 8           # 248 rows total (multiple of 8)


# ---------------- shared math helpers ----------------
def _layer_norm(x, w, b):
    mu = jnp.mean(x, axis=-1, keepdims=True)
    xc = x - mu
    var = jnp.mean(xc * xc, axis=-1, keepdims=True)
    return xc * jax.lax.rsqrt(var + LN_EPS) * w + b


def _gelu_exact(x):
    # PyTorch F.gelu default (erf formulation) — host-side reference only.
    return 0.5 * x * (1.0 + jax.lax.erf(x * (1.0 / math.sqrt(2.0))))


def _dot(a, b):
    return jnp.dot(a, b, preferred_element_type=jnp.float32)


def _dot_nt(a, b):
    # a @ b.T without an explicit transpose (contract last dims of both).
    return jax.lax.dot_general(a, b, (((1,), (1,)), ((), ())),
                               preferred_element_type=jnp.float32)


def _erf_poly(x):
    # Abramowitz & Stegun 7.1.26 (max abs error 1.5e-7).  Uses only exp / div /
    # where, which all lower cleanly in Mosaic.
    p = 0.3275911
    a1, a2, a3, a4, a5 = 0.254829592, -0.284496736, 1.421413741, -1.453152027, 1.061405429
    ax = jnp.abs(x)
    t = 1.0 / (1.0 + p * ax)
    poly = ((((a5 * t + a4) * t + a3) * t + a2) * t + a1) * t
    y = 1.0 - poly * jnp.exp(-ax * ax)
    return jnp.where(x >= 0, y, -y)


def _gelu_kernel(x):
    return 0.5 * x * (1.0 + _erf_poly(x * (1.0 / math.sqrt(2.0))))


def _softmax_mult(s, mask, *, approx):
    # Multiplicative 0/1 mask applied AFTER exp(s - rowmax).  Exact: softmax is
    # shift-invariant, so the unmasked row max is a valid shift.
    m = jnp.max(s, axis=-1, keepdims=True)
    e = jnp.exp(s - m) * mask
    denom = jnp.sum(e, axis=-1, keepdims=True)
    if approx:
        return e * pl.reciprocal(denom, approx=True)
    return e / denom


# ---------------- Pallas kernel ----------------
def net_kernel(x_ref, w_ref, b_ref, c_ref, out_ref, *, num_layers):
    D, FF, C = D_MODEL, DIM_FF, NUM_CLASSES

    def wsl(l, a, n):
        return w_ref[l, :, a:a + n]          # (32, n) static slice, point of use

    def bsl(l, a, n):
        return b_ref[l, :, a:a + n]          # (1, n) row vector, broadcasts over rows

    x = x_ref[...]                           # (16, 32) un-replicated residual stream

    # ---- full encoder layers (all but the last) ----
    for l in range(num_layers - 1):
        # constants at point of use (VMEM reloads nearly free; keeps vregs low)
        rep = c_ref[C_REP:C_REP + G_Q, 0:G_X]          # (64, 16)
        hmask = c_ref[C_HM:C_HM + G_Q, 0:D]            # (64, 32)
        kmask = c_ref[C_KM:C_KM + G_Q, 0:G_X]          # (64, 16)
        rsum = c_ref[C_RSUM:C_RSUM + G_X, 0:G_Q]       # (16, 64)

        qkv = _dot(x, wsl(l, W_QKV, 3 * D)) + bsl(l, B_QKV, 3 * D)      # (16, 96) fused QKV
        q, k, v = qkv[:, 0:D], qkv[:, D:2 * D], qkv[:, 2 * D:3 * D]
        qrep = _dot(rep, q) * hmask                                      # (64, 32) masked per-head Q
        s = _dot_nt(qrep, k)                                             # (64, 16) all heads, one matmul
        p = _softmax_mult(s, kmask, approx=True)
        a = _dot(p, v) * hmask                                           # (64, 32) head-h lanes only
        attn = _dot(_dot(rsum, a), wsl(l, W_O, D)) + bsl(l, B_O, D)      # (16, 32) concat heads + out-proj
        x = _layer_norm(x + attn, bsl(l, B_N1W, D), bsl(l, B_N1B, D))
        h1 = _gelu_kernel(_dot(x, wsl(l, W_1, FF)) + bsl(l, B_1, FF))    # (16, 128)
        h2 = _dot_nt(h1, wsl(l, W_2T, FF)) + bsl(l, B_2, D)              # (16, 32)
        x = _layer_norm(x + h2, bsl(l, B_N2W, D), bsl(l, B_N2B, D))

    # ---- last layer: only token-0 rows on the Q / residual / FFN / LN path ----
    l = num_layers - 1
    selq0 = c_ref[C_SELQ0:C_SELQ0 + BH, 0:G_X]         # (8, 16)
    hmask0 = c_ref[C_HM0:C_HM0 + BH, 0:D]              # (8, 32)
    kmask0 = c_ref[C_KM0:C_KM0 + BH, 0:G_X]            # (8, 16)
    rsum0 = c_ref[C_RSUM0:C_RSUM0 + BATCH, 0:BH]       # (2, 8)
    selx0 = c_ref[C_SELX0:C_SELX0 + BATCH, 0:G_X]      # (2, 16)

    qkv = _dot(x, wsl(l, W_QKV, 3 * D)) + bsl(l, B_QKV, 3 * D)           # K/V still use all tokens
    q, k, v = qkv[:, 0:D], qkv[:, D:2 * D], qkv[:, 2 * D:3 * D]
    q0 = _dot(selq0, q) * hmask0                                          # (8, 32)
    s0 = _dot_nt(q0, k)                                                   # (8, 16)
    p0 = _softmax_mult(s0, kmask0, approx=False)                          # exact recip on final layer
    a0 = _dot(p0, v) * hmask0                                             # (8, 32)
    attn0 = _dot(_dot(rsum0, a0), wsl(l, W_O, D)) + bsl(l, B_O, D)        # (2, 32)
    x0 = _dot(selx0, x)                                                   # (2, 32) token-0 residuals
    y = _layer_norm(x0 + attn0, bsl(l, B_N1W, D), bsl(l, B_N1B, D))
    h1 = _gelu_kernel(_dot(y, wsl(l, W_1, FF)) + bsl(l, B_1, FF))         # (2, 128)
    h2 = _dot_nt(h1, wsl(l, W_2T, FF)) + bsl(l, B_2, D)                   # (2, 32)
    feat = _layer_norm(y + h2, bsl(l, B_N2W, D), bsl(l, B_N2B, D))        # (2, 32)

    logits = _dot(feat, wsl(0, W_CLS, C)) + bsl(0, B_CLS, C)              # (2, 8)
    out_ref[...] = logits.astype(out_ref.dtype)


# ---------------- parameter construction (PyTorch layout) ----------------
def init_torch_style_params(key):
    L, D, FF, C = NUM_LAYERS, D_MODEL, DIM_FF, NUM_CLASSES
    std = 0.02
    keys = iter(jax.random.split(key, 10 * L + 4))
    layers = []
    for _ in range(L):
        layers.append(dict(
            in_proj_weight=jax.random.normal(next(keys), (3 * D, D), jnp.float32) * std,
            in_proj_bias=jax.random.normal(next(keys), (3 * D,), jnp.float32) * std,
            out_proj_weight=jax.random.normal(next(keys), (D, D), jnp.float32) * std,
            out_proj_bias=jax.random.normal(next(keys), (D,), jnp.float32) * std,
            linear1_weight=jax.random.normal(next(keys), (FF, D), jnp.float32) * std,
            linear1_bias=jax.random.normal(next(keys), (FF,), jnp.float32) * std,
            linear2_weight=jax.random.normal(next(keys), (D, FF), jnp.float32) * std,
            linear2_bias=jax.random.normal(next(keys), (D,), jnp.float32) * std,
            norm1_weight=jnp.ones((D,), jnp.float32),
            norm1_bias=jnp.zeros((D,), jnp.float32),
            norm2_weight=jnp.ones((D,), jnp.float32),
            norm2_bias=jnp.zeros((D,), jnp.float32),
        ))
    clf_weight = jax.random.normal(next(keys), (C, D), jnp.float32) * std
    clf_bias = jax.random.normal(next(keys), (C,), jnp.float32) * std
    return dict(layers=layers, clf_weight=clf_weight, clf_bias=clf_bias)


def prepare_kernel_params(p):
    """Host-side layout plumbing: pack all per-layer weights / biases into two
    lane-dense slabs (one weight slab, one bias/norm slab)."""
    L, D, FF, C = NUM_LAYERS, D_MODEL, DIM_FF, NUM_CLASSES
    scale = 1.0 / math.sqrt(HEAD_DIM)
    w_slab = np.zeros((L, D, W_COLS), np.float32)
    b_slab = np.zeros((L, 1, B_COLS), np.float32)
    for l, lp in enumerate(p["layers"]):
        ipw = np.asarray(lp["in_proj_weight"])
        ipb = np.asarray(lp["in_proj_bias"])
        wq = ipw[0:D].T * scale                      # scale folded into Wq / bq
        wk = ipw[D:2 * D].T
        wv = ipw[2 * D:3 * D].T
        w_slab[l, :, W_QKV:W_QKV + 3 * D] = np.concatenate([wq, wk, wv], axis=1)
        w_slab[l, :, W_O:W_O + D] = np.asarray(lp["out_proj_weight"]).T
        w_slab[l, :, W_1:W_1 + FF] = np.asarray(lp["linear1_weight"]).T
        w_slab[l, :, W_2T:W_2T + FF] = np.asarray(lp["linear2_weight"])   # (D, FF), contracted on last dim
        b_slab[l, 0, B_QKV:B_QKV + 3 * D] = np.concatenate(
            [ipb[0:D] * scale, ipb[D:2 * D], ipb[2 * D:3 * D]])
        b_slab[l, 0, B_O:B_O + D] = np.asarray(lp["out_proj_bias"])
        b_slab[l, 0, B_N1W:B_N1W + D] = np.asarray(lp["norm1_weight"])
        b_slab[l, 0, B_N1B:B_N1B + D] = np.asarray(lp["norm1_bias"])
        b_slab[l, 0, B_N2W:B_N2W + D] = np.asarray(lp["norm2_weight"])
        b_slab[l, 0, B_N2B:B_N2B + D] = np.asarray(lp["norm2_bias"])
        b_slab[l, 0, B_1:B_1 + FF] = np.asarray(lp["linear1_bias"])
        b_slab[l, 0, B_2:B_2 + D] = np.asarray(lp["linear2_bias"])
    # classifier packed into the layer-0 slots
    w_slab[0, :, W_CLS:W_CLS + C] = np.asarray(p["clf_weight"]).T
    b_slab[0, 0, B_CLS:B_CLS + C] = np.asarray(p["clf_bias"])
    return jnp.asarray(w_slab), jnp.asarray(b_slab)


def build_constants():
    """Constant 0/1 selector / mask matrices packed into one (C_ROWS, 128) slab."""
    B, S, D, H = BATCH, SEQ, D_MODEL, NHEAD
    hd = D // H
    rows_q = np.arange(G_Q)
    bq, hq, sq = rows_q // (H * S), (rows_q // S) % H, rows_q % S
    rows_x = np.arange(G_X)
    bx, sx = rows_x // S, rows_x % S
    dh = np.arange(D) // hd

    rep = ((bq[:, None] == bx[None, :]) & (sq[:, None] == sx[None, :])).astype(np.float32)
    hmask = (dh[None, :] == hq[:, None]).astype(np.float32)
    kmask = (bq[:, None] == bx[None, :]).astype(np.float32)
    rsum = rep.T

    rows0 = np.arange(BH)
    b0, h0 = rows0 // H, rows0 % H
    selq0 = ((b0[:, None] == bx[None, :]) & (sx[None, :] == 0)).astype(np.float32)
    hmask0 = (dh[None, :] == h0[:, None]).astype(np.float32)
    kmask0 = (b0[:, None] == bx[None, :]).astype(np.float32)
    rsum0 = (np.arange(B)[:, None] == b0[None, :]).astype(np.float32)
    selx0 = ((np.arange(B)[:, None] == bx[None, :]) & (sx[None, :] == 0)).astype(np.float32)

    slab = np.zeros((C_ROWS, 128), np.float32)
    slab[C_REP:C_REP + G_Q, 0:G_X] = rep
    slab[C_HM:C_HM + G_Q, 0:D] = hmask
    slab[C_KM:C_KM + G_Q, 0:G_X] = kmask
    slab[C_RSUM:C_RSUM + G_X, 0:G_Q] = rsum
    slab[C_SELQ0:C_SELQ0 + BH, 0:G_X] = selq0
    slab[C_HM0:C_HM0 + BH, 0:D] = hmask0
    slab[C_KM0:C_KM0 + BH, 0:G_X] = kmask0
    slab[C_RSUM0:C_RSUM0 + B, 0:BH] = rsum0
    slab[C_SELX0:C_SELX0 + B, 0:G_X] = selx0
    return jnp.asarray(slab)


# ---------------- wrapper ----------------
def net_forward(x, w_slab, b_slab, c_slab):
    """x: (B, S, D) float32 -> logits (B, C) float32."""
    B, S, D = x.shape
    C = NUM_CLASSES
    x2 = x.reshape(B * S, D).astype(jnp.float32)      # un-replicated residual rows

    def full_spec(shape):
        nd = len(shape)
        return pl.BlockSpec(shape, lambda i, _nd=nd: (0,) * _nd)

    kernel = functools.partial(net_kernel, num_layers=NUM_LAYERS)

    logits = pl.pallas_call(
        kernel,
        out_shape=jax.ShapeDtypeStruct((B, C), jnp.float32),
        grid_spec=pltpu.PrefetchScalarGridSpec(
            num_scalar_prefetch=0,
            grid=(1,),                       # whole forward fused in one invocation
            in_specs=[full_spec(x2.shape), full_spec(w_slab.shape),
                      full_spec(b_slab.shape), full_spec(c_slab.shape)],
            out_specs=full_spec((B, C)),
        ),
        compiler_params=pltpu.CompilerParams(
            dimension_semantics=("arbitrary",)),
    )(x2, w_slab, b_slab, c_slab)
    return logits


# ---------------- pure-JAX reference (mirrors the PyTorch module) ----------------
def reference_forward(x, p):
    D, H = D_MODEL, NHEAD
    hd = D // H
    h = x.astype(jnp.float32)
    for lp in p["layers"]:
        qkv = h @ lp["in_proj_weight"].T + lp["in_proj_bias"]
        q, k, v = jnp.split(qkv, 3, axis=-1)
        B_, S_, _ = q.shape

        def to_heads(t):
            return t.reshape(B_, S_, H, hd).transpose(0, 2, 1, 3)

        qh, kh, vh = to_heads(q), to_heads(k), to_heads(v)
        s = jnp.einsum("bhqd,bhkd->bhqk", qh, kh) / math.sqrt(hd)
        pr = jax.nn.softmax(s, axis=-1)
        a = jnp.einsum("bhqk,bhkd->bhqd", pr, vh)
        a = a.transpose(0, 2, 1, 3).reshape(B_, S_, D)
        attn = a @ lp["out_proj_weight"].T + lp["out_proj_bias"]
        h = _layer_norm(h + attn, lp["norm1_weight"], lp["norm1_bias"])
        ff = _gelu_exact(h @ lp["linear1_weight"].T + lp["linear1_bias"])
        ff = ff @ lp["linear2_weight"].T + lp["linear2_bias"]
        h = _layer_norm(h + ff, lp["norm2_weight"], lp["norm2_bias"])
    feat = h[:, 0]
    return feat @ p["clf_weight"].T + p["clf_bias"]


if __name__ == "__main__":
    key = jax.random.PRNGKey(0)
    k_x, k_p = jax.random.split(key)
    x = jax.random.normal(k_x, (BATCH, SEQ, D_MODEL), jnp.float32)

    torch_params = init_torch_style_params(k_p)
    w_slab, b_slab = prepare_kernel_params(torch_params)
    c_slab = build_constants()

    logits = net_forward(x, w_slab, b_slab, c_slab)
    jax.block_until_ready(logits)
    assert logits.shape == (BATCH, NUM_CLASSES)
    assert bool(jnp.all(jnp.isfinite(logits)))

    ref = reference_forward(x, torch_params)
    max_err = float(jnp.max(jnp.abs(logits - ref)))
    assert max_err < 2e-3, f"kernel vs reference mismatch: {max_err}"

    print("KERNEL_OK")
</pallas_src>

<mosaic_0001>
module attributes {stable_mosaic.version = 11 : i64} {
  func.func @net_kernel(%arg0: i32, %arg1: memref<16x32xf32, #tpu.memory_space<vmem>>, %arg2: memref<2x32x512xf32, #tpu.memory_space<vmem>>, %arg3: memref<2x1x512xf32, #tpu.memory_space<vmem>>, %arg4: memref<248x128xf32, #tpu.memory_space<vmem>>, %arg5: memref<2x8xf32, #tpu.memory_space<vmem>>) attributes {dimension_semantics = [#tpu.dimension_semantics<arbitrary>], iteration_bounds = array<i64: 1>, scalar_prefetch = 0 : i64, scratch_operands = 0 : i64, tpu.core_type = #tpu.core_type<tc>, window_params = [{pipeline_mode = #tpu.pipeline_mode<synchronous>, transform_indices = @transform_0, window_bounds = array<i64: 16, 32>}, {pipeline_mode = #tpu.pipeline_mode<synchronous>, transform_indices = @transform_1, window_bounds = array<i64: 2, 32, 512>}, {pipeline_mode = #tpu.pipeline_mode<synchronous>, transform_indices = @transform_2, window_bounds = array<i64: 2, 1, 512>}, {pipeline_mode = #tpu.pipeline_mode<synchronous>, transform_indices = @transform_3, window_bounds = array<i64: 248, 128>}, {pipeline_mode = #tpu.pipeline_mode<synchronous>, transform_indices = @transform_4, window_bounds = array<i64: 2, 8>}]} {
    %c0 = arith.constant 0 : index
    %c0_0 = arith.constant 0 : index
    %0 = vector.load %arg1[%c0, %c0_0] : memref<16x32xf32, #tpu.memory_space<vmem>>, vector<16x32xf32>
    %c0_1 = arith.constant 0 : index
    %c0_2 = arith.constant 0 : index
    %1 = vector.load %arg4[%c0_1, %c0_2] : memref<248x128xf32, #tpu.memory_space<vmem>>, vector<64x16xf32>
    %c64 = arith.constant 64 : index
    %c0_3 = arith.constant 0 : index
    %2 = vector.load %arg4[%c64, %c0_3] : memref<248x128xf32, #tpu.memory_space<vmem>>, vector<64x32xf32>
    %c128 = arith.constant 128 : index
    %c0_4 = arith.constant 0 : index
    %3 = vector.load %arg4[%c128, %c0_4] : memref<248x128xf32, #tpu.memory_space<vmem>>, vector<64x16xf32>
    %c192 = arith.constant 192 : index
    %c0_5 = arith.constant 0 : index
    %4 = vector.load %arg4[%c192, %c0_5] : memref<248x128xf32, #tpu.memory_space<vmem>>, vector<16x64xf32>
    %c0_6 = arith.constant 0 : index
    %c0_7 = arith.constant 0 : index
    %c0_8 = arith.constant 0 : index
    %5 = vector.load %arg2[%c0_6, %c0_7, %c0_8] : memref<2x32x512xf32, #tpu.memory_space<vmem>>, vector<1x32x96xf32>
    %6 = vector.shape_cast %5 : vector<1x32x96xf32> to vector<32x96xf32>
    %cst = arith.constant dense<0.000000e+00> : vector<16x96xf32>
    %7 = tpu.matmul %0, %6, %cst {dimension_numbers = #tpu.dot_dimension_numbers<[1], [0], [0], [1], [0, 0, 1, 1], [], []>} : vector<16x32xf32>, vector<32x96xf32>, vector<16x96xf32> -> vector<16x96xf32>
    %c0_9 = arith.constant 0 : index
    %c0_10 = arith.constant 0 : index
    %c0_11 = arith.constant 0 : index
    %8 = vector.load %arg3[%c0_9, %c0_10, %c0_11] : memref<2x1x512xf32, #tpu.memory_space<vmem>>, vector<1x1x96xf32>
    %9 = vector.shape_cast %8 : vector<1x1x96xf32> to vector<1x96xf32>
    %10 = vector.broadcast %9 : vector<1x96xf32> to vector<16x96xf32>
    %11 = arith.addf %7, %10 : vector<16x96xf32>
    %12 = vector.extract_strided_slice %11 {offsets = [0, 0], sizes = [16, 32], strides = [1, 1]} : vector<16x96xf32> to vector<16x32xf32>
    %13 = vector.extract_strided_slice %11 {offsets = [0, 32], sizes = [16, 32], strides = [1, 1]} : vector<16x96xf32> to vector<16x32xf32>
    %14 = vector.extract_strided_slice %11 {offsets = [0, 64], sizes = [16, 32], strides = [1, 1]} : vector<16x96xf32> to vector<16x32xf32>
    %cst_12 = arith.constant dense<0.000000e+00> : vector<64x32xf32>
    %15 = tpu.matmul %1, %12, %cst_12 {dimension_numbers = #tpu.dot_dimension_numbers<[1], [0], [0], [1], [0, 0, 1, 1], [], []>} : vector<64x16xf32>, vector<16x32xf32>, vector<64x32xf32> -> vector<64x32xf32>
    %16 = arith.mulf %15, %2 : vector<64x32xf32>
    %cst_13 = arith.constant dense<0.000000e+00> : vector<64x16xf32>
    %17 = tpu.matmul %16, %13, %cst_13 {dimension_numbers = #tpu.dot_dimension_numbers<[1], [1], [0], [0], [0, 0, 1, 0], [], []>} : vector<64x32xf32>, vector<16x32xf32>, vector<64x16xf32> -> vector<64x16xf32>
    %cst_14 = arith.constant dense<0xFF800000> : vector<64xf32>
    %18 = vector.multi_reduction <maximumf>, %17, %cst_14 [1] : vector<64x16xf32> to vector<64xf32>
    %19 = vector.shape_cast %18 : vector<64xf32> to vector<64x1xf32>
    %20 = vector.broadcast %19 : vector<64x1xf32> to vector<64x16xf32>
    %21 = arith.subf %17, %20 : vector<64x16xf32>
    %22 = math.exp %21 : vector<64x16xf32>
    %23 = arith.mulf %22, %3 : vector<64x16xf32>
    %cst_15 = arith.constant dense<0.000000e+00> : vector<64xf32>
    %24 = vector.multi_reduction <add>, %23, %cst_15 [1] : vector<64x16xf32> to vector<64xf32>
    %25 = vector.shape_cast %24 : vector<64xf32> to vector<64x1xf32>
    %26 = tpu.reciprocal %25 {approx = true} : vector<64x1xf32> -> vector<64x1xf32>
    %27 = vector.broadcast %26 : vector<64x1xf32> to vector<64x16xf32>
    %28 = arith.mulf %23, %27 : vector<64x16xf32>
    %cst_16 = arith.constant dense<0.000000e+00> : vector<64x32xf32>
    %29 = tpu.matmul %28, %14, %cst_16 {dimension_numbers = #tpu.dot_dimension_numbers<[1], [0], [0], [1], [0, 0, 1, 1], [], []>} : vector<64x16xf32>, vector<16x32xf32>, vector<64x32xf32> -> vector<64x32xf32>
    %30 = arith.mulf %29, %2 : vector<64x32xf32>
    %cst_17 = arith.constant dense<0.000000e+00> : vector<16x32xf32>
    %31 = tpu.matmul %4, %30, %cst_17 {dimension_numbers = #tpu.dot_dimension_numbers<[1], [0], [0], [1], [0, 0, 1, 1], [], []>} : vector<16x64xf32>, vector<64x32xf32>, vector<16x32xf32> -> vector<16x32xf32>
    %c0_18 = arith.constant 0 : index
    %c0_19 = arith.constant 0 : index
    %c96 = arith.constant 96 : index
    %32 = vector.load %arg2[%c0_18, %c0_19, %c96] : memref<2x32x512xf32, #tpu.memory_space<vmem>>, vector<1x32x32xf32>
    %33 = vector.shape_cast %32 : vector<1x32x32xf32> to vector<32x32xf32>
    %cst_20 = arith.constant dense<0.000000e+00> : vector<16x32xf32>
    %34 = tpu.matmul %31, %33, %cst_20 {dimension_numbers = #tpu.dot_dimension_numbers<[1], [0], [0], [1], [0, 0, 1, 1], [], []>} : vector<16x32xf32>, vector<32x32xf32>, vector<16x32xf32> -> vector<16x32xf32>
    %c0_21 = arith.constant 0 : index
    %c0_22 = arith.constant 0 : index
    %c96_23 = arith.constant 96 : index
    %35 = vector.load %arg3[%c0_21, %c0_22, %c96_23] : memref<2x1x512xf32, #tpu.memory_space<vmem>>, vector<1x1x32xf32>
    %36 = vector.shape_cast %35 : vector<1x1x32xf32> to vector<1x32xf32>
    %37 = vector.broadcast %36 : vector<1x32xf32> to vector<16x32xf32>
    %38 = arith.addf %34, %37 : vector<16x32xf32>
    %39 = arith.addf %0, %38 : vector<16x32xf32>
    %c0_24 = arith.constant 0 : index
    %c0_25 = arith.constant 0 : index
    %c128_26 = arith.constant 128 : index
    %40 = vector.load %arg3[%c0_24, %c0_25, %c128_26] : memref<2x1x512xf32, #tpu.memory_space<vmem>>, vector<1x1x32xf32>
    %41 = vector.shape_cast %40 : vector<1x1x32xf32> to vector<1x32xf32>
    %c0_27 = arith.constant 0 : index
    %c0_28 = arith.constant 0 : index
    %c160 = arith.constant 160 : index
    %42 = vector.load %arg3[%c0_27, %c0_28, %c160] : memref<2x1x512xf32, #tpu.memory_space<vmem>>, vector<1x1x32xf32>
    %43 = vector.shape_cast %42 : vector<1x1x32xf32> to vector<1x32xf32>
    %cst_29 = arith.constant dense<0.000000e+00> : vector<16xf32>
    %44 = vector.multi_reduction <add>, %39, %cst_29 [1] : vector<16x32xf32> to vector<16xf32>
    %45 = vector.shape_cast %44 : vector<16xf32> to vector<16x1xf32>
    %cst_30 = arith.constant 3.200000e+01 : f32
    %46 = vector.broadcast %cst_30 : f32 to vector<16x1xf32>
    %47 = arith.divf %45, %46 : vector<16x1xf32>
    %48 = vector.broadcast %47 : vector<16x1xf32> to vector<16x32xf32>
    %49 = arith.subf %39, %48 : vector<16x32xf32>
    %50 = arith.mulf %49, %49 : vector<16x32xf32>
    %cst_31 = arith.constant dense<0.000000e+00> : vector<16xf32>
    %51 = vector.multi_reduction <add>, %50, %cst_31 [1] : vector<16x32xf32> to vector<16xf32>
    %52 = vector.shape_cast %51 : vector<16xf32> to vector<16x1xf32>
    %cst_32 = arith.constant 3.200000e+01 : f32
    %53 = vector.broadcast %cst_32 : f32 to vector<16x1xf32>
    %54 = arith.divf %52, %53 : vector<16x1xf32>
    %cst_33 = arith.constant 9.99999974E-6 : f32
    %55 = vector.broadcast %cst_33 : f32 to vector<16x1xf32>
    %56 = arith.addf %54, %55 : vector<16x1xf32>
    %57 = math.rsqrt %56 : vector<16x1xf32>
    %58 = vector.broadcast %57 : vector<16x1xf32> to vector<16x32xf32>
    %59 = arith.mulf %49, %58 : vector<16x32xf32>
    %60 = vector.broadcast %41 : vector<1x32xf32> to vector<16x32xf32>
    %61 = arith.mulf %59, %60 : vector<16x32xf32>
    %62 = vector.broadcast %43 : vector<1x32xf32> to vector<16x32xf32>
    %63 = arith.addf %61, %62 : vector<16x32xf32>
    %c0_34 = arith.constant 0 : index
    %c0_35 = arith.constant 0 : index
    %c128_36 = arith.constant 128 : index
    %64 = vector.load %arg2[%c0_34, %c0_35, %c128_36] : memref<2x32x512xf32, #tpu.memory_space<vmem>>, vector<1x32x128xf32>
    %65 = vector.shape_cast %64 : vector<1x32x128xf32> to vector<32x128xf32>
    %cst_37 = arith.constant dense<0.000000e+00> : vector<16x128xf32>
    %66 = tpu.matmul %63, %65, %cst_37 {dimension_numbers = #tpu.dot_dimension_numbers<[1], [0], [0], [1], [0, 0, 1, 1], [], []>} : vector<16x32xf32>, vector<32x128xf32>, vector<16x128xf32> -> vector<16x128xf32>
    %c0_38 = arith.constant 0 : index
    %c0_39 = arith.constant 0 : index
    %c256 = arith.constant 256 : index
    %67 = vector.load %arg3[%c0_38, %c0_39, %c256] : memref<2x1x512xf32, #tpu.memory_space<vmem>>, vector<1x1x128xf32>
    %68 = vector.shape_cast %67 : vector<1x1x128xf32> to vector<1x128xf32>
    %69 = vector.broadcast %68 : vector<1x128xf32> to vector<16x128xf32>
    %70 = arith.addf %66, %69 : vector<16x128xf32>
    %cst_40 = arith.constant 5.000000e-01 : f32
    %71 = vector.broadcast %cst_40 : f32 to vector<16x128xf32>
    %72 = arith.mulf %71, %70 : vector<16x128xf32>
    %cst_41 = arith.constant 0.707106769 : f32
    %73 = vector.broadcast %cst_41 : f32 to vector<16x128xf32>
    %74 = arith.mulf %70, %73 : vector<16x128xf32>
    %75 = math.absf %74 : vector<16x128xf32>
    %cst_42 = arith.constant 0.327591091 : f32
    %76 = vector.broadcast %cst_42 : f32 to vector<16x128xf32>
    %77 = arith.mulf %76, %75 : vector<16x128xf32>
    %cst_43 = arith.constant 1.000000e+00 : f32
    %78 = vector.broadcast %cst_43 : f32 to vector<16x128xf32>
    %79 = arith.addf %78, %77 : vector<16x128xf32>
    %cst_44 = arith.constant 1.000000e+00 : f32
    %80 = vector.broadcast %cst_44 : f32 to vector<16x128xf32>
    %81 = arith.divf %80, %79 : vector<16x128xf32>
    %cst_45 = arith.constant 1.06140542 : f32
    %82 = vector.broadcast %cst_45 : f32 to vector<16x128xf32>
    %83 = arith.mulf %82, %81 : vector<16x128xf32>
    %cst_46 = arith.constant -1.45315206 : f32
    %84 = vector.broadcast %cst_46 : f32 to vector<16x128xf32>
    %85 = arith.addf %83, %84 : vector<16x128xf32>
    %86 = arith.mulf %85, %81 : vector<16x128xf32>
    %cst_47 = arith.constant 1.42141378 : f32
    %87 = vector.broadcast %cst_47 : f32 to vector<16x128xf32>
    %88 = arith.addf %86, %87 : vector<16x128xf32>
    %89 = arith.mulf %88, %81 : vector<16x128xf32>
    %cst_48 = arith.constant -0.284496725 : f32
    %90 = vector.broadcast %cst_48 : f32 to vector<16x128xf32>
    %91 = arith.addf %89, %90 : vector<16x128xf32>
    %92 = arith.mulf %91, %81 : vector<16x128xf32>
    %cst_49 = arith.constant 0.254829586 : f32
    %93 = vector.broadcast %cst_49 : f32 to vector<16x128xf32>
    %94 = arith.addf %92, %93 : vector<16x128xf32>
    %95 = arith.mulf %94, %81 : vector<16x128xf32>
    %cst_50 = arith.constant 0.000000e+00 : f32
    %96 = vector.broadcast %cst_50 : f32 to vector<16x128xf32>
    %97 = arith.subf %96, %75 : vector<16x128xf32>
    %98 = arith.mulf %97, %75 : vector<16x128xf32>
    %99 = math.exp %98 : vector<16x128xf32>
    %100 = arith.mulf %95, %99 : vector<16x128xf32>
    %cst_51 = arith.constant 1.000000e+00 : f32
    %101 = vector.broadcast %cst_51 : f32 to vector<16x128xf32>
    %102 = arith.subf %101, %100 : vector<16x128xf32>
    %cst_52 = arith.constant 0.000000e+00 : f32
    %103 = vector.broadcast %cst_52 : f32 to vector<16x128xf32>
    %104 = arith.cmpf oge, %74, %103 : vector<16x128xf32>
    %cst_53 = arith.constant 0.000000e+00 : f32
    %105 = vector.broadcast %cst_53 : f32 to vector<16x128xf32>
    %106 = arith.subf %105, %102 : vector<16x128xf32>
    %107 = arith.select %104, %102, %106 : vector<16x128xi1>, vector<16x128xf32>
    %cst_54 = arith.constant 1.000000e+00 : f32
    %108 = vector.broadcast %cst_54 : f32 to vector<16x128xf32>
    %109 = arith.addf %108, %107 : vector<16x128xf32>
    %110 = arith.mulf %72, %109 : vector<16x128xf32>
    %c0_55 = arith.constant 0 : index
    %c0_56 = arith.constant 0 : index
    %c256_57 = arith.constant 256 : index
    %111 = vector.load %arg2[%c0_55, %c0_56, %c256_57] : memref<2x32x512xf32, #tpu.memory_space<vmem>>, vector<1x32x128xf32>
    %112 = vector.shape_cast %111 : vector<1x32x128xf32> to vector<32x128xf32>
    %cst_58 = arith.constant dense<0.000000e+00> : vector<16x32xf32>
    %113 = tpu.matmul %110, %112, %cst_58 {dimension_numbers = #tpu.dot_dimension_numbers<[1], [1], [0], [0], [0, 0, 1, 0], [], []>} : vector<16x128xf32>, vector<32x128xf32>, vector<16x32xf32> -> vector<16x32xf32>
    %c0_59 = arith.constant 0 : index
    %c0_60 = arith.constant 0 : index
    %c384 = arith.constant 384 : index
    %114 = vector.load %arg3[%c0_59, %c0_60, %c384] : memref<2x1x512xf32, #tpu.memory_space<vmem>>, vector<1x1x32xf32>
    %115 = vector.shape_cast %114 : vector<1x1x32xf32> to vector<1x32xf32>
    %116 = vector.broadcast %115 : vector<1x32xf32> to vector<16x32xf32>
    %117 = arith.addf %113, %116 : vector<16x32xf32>
    %118 = arith.addf %63, %117 : vector<16x32xf32>
    %c0_61 = arith.constant 0 : index
    %c0_62 = arith.constant 0 : index
    %c192_63 = arith.constant 192 : index
    %119 = vector.load %arg3[%c0_61, %c0_62, %c192_63] : memref<2x1x512xf32, #tpu.memory_space<vmem>>, vector<1x1x32xf32>
    %120 = vector.shape_cast %119 : vector<1x1x32xf32> to vector<1x32xf32>
    %c0_64 = arith.constant 0 : index
    %c0_65 = arith.constant 0 : index
    %c224 = arith.constant 224 : index
    %121 = vector.load %arg3[%c0_64, %c0_65, %c224] : memref<2x1x512xf32, #tpu.memory_space<vmem>>, vector<1x1x32xf32>
    %122 = vector.shape_cast %121 : vector<1x1x32xf32> to vector<1x32xf32>
    %cst_66 = arith.constant dense<0.000000e+00> : vector<16xf32>
    %123 = vector.multi_reduction <add>, %118, %cst_66 [1] : vector<16x32xf32> to vector<16xf32>
    %124 = vector.shape_cast %123 : vector<16xf32> to vector<16x1xf32>
    %cst_67 = arith.constant 3.200000e+01 : f32
    %125 = vector.broadcast %cst_67 : f32 to vector<16x1xf32>
    %126 = arith.divf %124, %125 : vector<16x1xf32>
    %127 = vector.broadcast %126 : vector<16x1xf32> to vector<16x32xf32>
    %128 = arith.subf %118, %127 : vector<16x32xf32>
    %129 = arith.mulf %128, %128 : vector<16x32xf32>
    %cst_68 = arith.constant dense<0.000000e+00> : vector<16xf32>
    %130 = vector.multi_reduction <add>, %129, %cst_68 [1] : vector<16x32xf32> to vector<16xf32>
    %131 = vector.shape_cast %130 : vector<16xf32> to vector<16x1xf32>
    %cst_69 = arith.constant 3.200000e+01 : f32
    %132 = vector.broadcast %cst_69 : f32 to vector<16x1xf32>
    %133 = arith.divf %131, %132 : vector<16x1xf32>
    %cst_70 = arith.constant 9.99999974E-6 : f32
    %134 = vector.broadcast %cst_70 : f32 to vector<16x1xf32>
    %135 = arith.addf %133, %134 : vector<16x1xf32>
    %136 = math.rsqrt %135 : vector<16x1xf32>
    %137 = vector.broadcast %136 : vector<16x1xf32> to vector<16x32xf32>
    %138 = arith.mulf %128, %137 : vector<16x32xf32>
    %139 = vector.broadcast %120 : vector<1x32xf32> to vector<16x32xf32>
    %140 = arith.mulf %138, %139 : vector<16x32xf32>
    %141 = vector.broadcast %122 : vector<1x32xf32> to vector<16x32xf32>
    %142 = arith.addf %140, %141 : vector<16x32xf32>
    %c208 = arith.constant 208 : index
    %c0_71 = arith.constant 0 : index
    %143 = vector.load %arg4[%c208, %c0_71] : memref<248x128xf32, #tpu.memory_space<vmem>>, vector<8x16xf32>
    %c216 = arith.constant 216 : index
    %c0_72 = arith.constant 0 : index
    %144 = vector.load %arg4[%c216, %c0_72] : memref<248x128xf32, #tpu.memory_space<vmem>>, vector<8x32xf32>
    %c224_73 = arith.constant 224 : index
    %c0_74 = arith.constant 0 : index
    %145 = vector.load %arg4[%c224_73, %c0_74] : memref<248x128xf32, #tpu.memory_space<vmem>>, vector<8x16xf32>
    %c232 = arith.constant 232 : index
    %c0_75 = arith.constant 0 : index
    %146 = vector.load %arg4[%c232, %c0_75] : memref<248x128xf32, #tpu.memory_space<vmem>>, vector<2x8xf32>
    %c240 = arith.constant 240 : index
    %c0_76 = arith.constant 0 : index
    %147 = vector.load %arg4[%c240, %c0_76] : memref<248x128xf32, #tpu.memory_space<vmem>>, vector<2x16xf32>
    %c1 = arith.constant 1 : index
    %c0_77 = arith.constant 0 : index
    %c0_78 = arith.constant 0 : index
    %148 = vector.load %arg2[%c1, %c0_77, %c0_78] : memref<2x32x512xf32, #tpu.memory_space<vmem>>, vector<1x32x96xf32>
    %149 = vector.shape_cast %148 : vector<1x32x96xf32> to vector<32x96xf32>
    %cst_79 = arith.constant dense<0.000000e+00> : vector<16x96xf32>
    %150 = tpu.matmul %142, %149, %cst_79 {dimension_numbers = #tpu.dot_dimension_numbers<[1], [0], [0], [1], [0, 0, 1, 1], [], []>} : vector<16x32xf32>, vector<32x96xf32>, vector<16x96xf32> -> vector<16x96xf32>
    %c1_80 = arith.constant 1 : index
    %c0_81 = arith.constant 0 : index
    %c0_82 = arith.constant 0 : index
    %151 = vector.load %arg3[%c1_80, %c0_81, %c0_82] : memref<2x1x512xf32, #tpu.memory_space<vmem>>, vector<1x1x96xf32>
    %152 = vector.shape_cast %151 : vector<1x1x96xf32> to vector<1x96xf32>
    %153 = vector.broadcast %152 : vector<1x96xf32> to vector<16x96xf32>
    %154 = arith.addf %150, %153 : vector<16x96xf32>
    %155 = vector.extract_strided_slice %154 {offsets = [0, 0], sizes = [16, 32], strides = [1, 1]} : vector<16x96xf32> to vector<16x32xf32>
    %156 = vector.extract_strided_slice %154 {offsets = [0, 32], sizes = [16, 32], strides = [1, 1]} : vector<16x96xf32> to vector<16x32xf32>
    %157 = vector.extract_strided_slice %154 {offsets = [0, 64], sizes = [16, 32], strides = [1, 1]} : vector<16x96xf32> to vector<16x32xf32>
    %cst_83 = arith.constant dense<0.000000e+00> : vector<8x32xf32>
    %158 = tpu.matmul %143, %155, %cst_83 {dimension_numbers = #tpu.dot_dimension_numbers<[1], [0], [0], [1], [0, 0, 1, 1], [], []>} : vector<8x16xf32>, vector<16x32xf32>, vector<8x32xf32> -> vector<8x32xf32>
    %159 = arith.mulf %158, %144 : vector<8x32xf32>
    %cst_84 = arith.constant dense<0.000000e+00> : vector<8x16xf32>
    %160 = tpu.matmul %159, %156, %cst_84 {dimension_numbers = #tpu.dot_dimension_numbers<[1], [1], [0], [0], [0, 0, 1, 0], [], []>} : vector<8x32xf32>, vector<16x32xf32>, vector<8x16xf32> -> vector<8x16xf32>
    %cst_85 = arith.constant dense<0xFF800000> : vector<8xf32>
    %161 = vector.multi_reduction <maximumf>, %160, %cst_85 [1] : vector<8x16xf32> to vector<8xf32>
    %162 = vector.shape_cast %161 : vector<8xf32> to vector<8x1xf32>
    %163 = vector.broadcast %162 : vector<8x1xf32> to vector<8x16xf32>
    %164 = arith.subf %160, %163 : vector<8x16xf32>
    %165 = math.exp %164 : vector<8x16xf32>
    %166 = arith.mulf %165, %145 : vector<8x16xf32>
    %cst_86 = arith.constant dense<0.000000e+00> : vector<8xf32>
    %167 = vector.multi_reduction <add>, %166, %cst_86 [1] : vector<8x16xf32> to vector<8xf32>
    %168 = vector.shape_cast %167 : vector<8xf32> to vector<8x1xf32>
    %169 = vector.broadcast %168 : vector<8x1xf32> to vector<8x16xf32>
    %170 = arith.divf %166, %169 : vector<8x16xf32>
    %cst_87 = arith.constant dense<0.000000e+00> : vector<8x32xf32>
    %171 = tpu.matmul %170, %157, %cst_87 {dimension_numbers = #tpu.dot_dimension_numbers<[1], [0], [0], [1], [0, 0, 1, 1], [], []>} : vector<8x16xf32>, vector<16x32xf32>, vector<8x32xf32> -> vector<8x32xf32>
    %172 = arith.mulf %171, %144 : vector<8x32xf32>
    %cst_88 = arith.constant dense<0.000000e+00> : vector<2x32xf32>
    %173 = tpu.matmul %146, %172, %cst_88 {dimension_numbers = #tpu.dot_dimension_numbers<[1], [0], [0], [1], [0, 0, 1, 1], [], []>} : vector<2x8xf32>, vector<8x32xf32>, vector<2x32xf32> -> vector<2x32xf32>
    %c1_89 = arith.constant 1 : index
    %c0_90 = arith.constant 0 : index
    %c96_91 = arith.constant 96 : index
    %174 = vector.load %arg2[%c1_89, %c0_90, %c96_91] : memref<2x32x512xf32, #tpu.memory_space<vmem>>, vector<1x32x32xf32>
    %175 = vector.shape_cast %174 : vector<1x32x32xf32> to vector<32x32xf32>
    %cst_92 = arith.constant dense<0.000000e+00> : vector<2x32xf32>
    %176 = tpu.matmul %173, %175, %cst_92 {dimension_numbers = #tpu.dot_dimension_numbers<[1], [0], [0], [1], [0, 0, 1, 1], [], []>} : vector<2x32xf32>, vector<32x32xf32>, vector<2x32xf32> -> vector<2x32xf32>
    %c1_93 = arith.constant 1 : index
    %c0_94 = arith.constant 0 : index
    %c96_95 = arith.constant 96 : index
    %177 = vector.load %arg3[%c1_93, %c0_94, %c96_95] : memref<2x1x512xf32, #tpu.memory_space<vmem>>, vector<1x1x32xf32>
    %178 = vector.shape_cast %177 : vector<1x1x32xf32> to vector<1x32xf32>
    %179 = vector.broadcast %178 : vector<1x32xf32> to vector<2x32xf32>
    %180 = arith.addf %176, %179 : vector<2x32xf32>
    %cst_96 = arith.constant dense<0.000000e+00> : vector<2x32xf32>
    %181 = tpu.matmul %147, %142, %cst_96 {dimension_numbers = #tpu.dot_dimension_numbers<[1], [0], [0], [1], [0, 0, 1, 1], [], []>} : vector<2x16xf32>, vector<16x32xf32>, vector<2x32xf32> -> vector<2x32xf32>
    %182 = arith.addf %181, %180 : vector<2x32xf32>
    %c1_97 = arith.constant 1 : index
    %c0_98 = arith.constant 0 : index
    %c128_99 = arith.constant 128 : index
    %183 = vector.load %arg3[%c1_97, %c0_98, %c128_99] : memref<2x1x512xf32, #tpu.memory_space<vmem>>, vector<1x1x32xf32>
    %184 = vector.shape_cast %183 : vector<1x1x32xf32> to vector<1x32xf32>
    %c1_100 = arith.constant 1 : index
    %c0_101 = arith.constant 0 : index
    %c160_102 = arith.constant 160 : index
    %185 = vector.load %arg3[%c1_100, %c0_101, %c160_102] : memref<2x1x512xf32, #tpu.memory_space<vmem>>, vector<1x1x32xf32>
    %186 = vector.shape_cast %185 : vector<1x1x32xf32> to vector<1x32xf32>
    %cst_103 = arith.constant dense<0.000000e+00> : vector<2xf32>
    %187 = vector.multi_reduction <add>, %182, %cst_103 [1] : vector<2x32xf32> to vector<2xf32>
    %188 = vector.shape_cast %187 : vector<2xf32> to vector<2x1xf32>
    %cst_104 = arith.constant 3.200000e+01 : f32
    %189 = vector.broadcast %cst_104 : f32 to vector<2x1xf32>
    %190 = arith.divf %188, %189 : vector<2x1xf32>
    %191 = vector.broadcast %190 : vector<2x1xf32> to vector<2x32xf32>
    %192 = arith.subf %182, %191 : vector<2x32xf32>
    %193 = arith.mulf %192, %192 : vector<2x32xf32>
    %cst_105 = arith.constant dense<0.000000e+00> : vector<2xf32>
    %194 = vector.multi_reduction <add>, %193, %cst_105 [1] : vector<2x32xf32> to vector<2xf32>
    %195 = vector.shape_cast %194 : vector<2xf32> to vector<2x1xf32>
    %cst_106 = arith.constant 3.200000e+01 : f32
    %196 = vector.broadcast %cst_106 : f32 to vector<2x1xf32>
    %197 = arith.divf %195, %196 : vector<2x1xf32>
    %cst_107 = arith.constant 9.99999974E-6 : f32
    %198 = vector.broadcast %cst_107 : f32 to vector<2x1xf32>
    %199 = arith.addf %197, %198 : vector<2x1xf32>
    %200 = math.rsqrt %199 : vector<2x1xf32>
    %201 = vector.broadcast %200 : vector<2x1xf32> to vector<2x32xf32>
    %202 = arith.mulf %192, %201 : vector<2x32xf32>
    %203 = vector.broadcast %184 : vector<1x32xf32> to vector<2x32xf32>
    %204 = arith.mulf %202, %203 : vector<2x32xf32>
    %205 = vector.broadcast %186 : vector<1x32xf32> to vector<2x32xf32>
    %206 = arith.addf %204, %205 : vector<2x32xf32>
    %c1_108 = arith.constant 1 : index
    %c0_109 = arith.constant 0 : index
    %c128_110 = arith.constant 128 : index
    %207 = vector.load %arg2[%c1_108, %c0_109, %c128_110] : memref<2x32x512xf32, #tpu.memory_space<vmem>>, vector<1x32x128xf32>
    %208 = vector.shape_cast %207 : vector<1x32x128xf32> to vector<32x128xf32>
    %cst_111 = arith.constant dense<0.000000e+00> : vector<2x128xf32>
    %209 = tpu.matmul %206, %208, %cst_111 {dimension_numbers = #tpu.dot_dimension_numbers<[1], [0], [0], [1], [0, 0, 1, 1], [], []>} : vector<2x32xf32>, vector<32x128xf32>, vector<2x128xf32> -> vector<2x128xf32>
    %c1_112 = arith.constant 1 : index
    %c0_113 = arith.constant 0 : index
    %c256_114 = arith.constant 256 : index
    %210 = vector.load %arg3[%c1_112, %c0_113, %c256_114] : memref<2x1x512xf32, #tpu.memory_space<vmem>>, vector<1x1x128xf32>
    %211 = vector.shape_cast %210 : vector<1x1x128xf32> to vector<1x128xf32>
    %212 = vector.broadcast %211 : vector<1x128xf32> to vector<2x128xf32>
    %213 = arith.addf %209, %212 : vector<2x128xf32>
    %cst_115 = arith.constant 5.000000e-01 : f32
    %214 = vector.broadcast %cst_115 : f32 to vector<2x128xf32>
    %215 = arith.mulf %214, %213 : vector<2x128xf32>
    %cst_116 = arith.constant 0.707106769 : f32
    %216 = vector.broadcast %cst_116 : f32 to vector<2x128xf32>
    %217 = arith.mulf %213, %216 : vector<2x128xf32>
    %218 = math.absf %217 : vector<2x128xf32>
    %cst_117 = arith.constant 0.327591091 : f32
    %219 = vector.broadcast %cst_117 : f32 to vector<2x128xf32>
    %220 = arith.mulf %219, %218 : vector<2x128xf32>
    %cst_118 = arith.constant 1.000000e+00 : f32
    %221 = vector.broadcast %cst_118 : f32 to vector<2x128xf32>
    %222 = arith.addf %221, %220 : vector<2x128xf32>
    %cst_119 = arith.constant 1.000000e+00 : f32
    %223 = vector.broadcast %cst_119 : f32 to vector<2x128xf32>
    %224 = arith.divf %223, %222 : vector<2x128xf32>
    %cst_120 = arith.constant 1.06140542 : f32
    %225 = vector.broadcast %cst_120 : f32 to vector<2x128xf32>
    %226 = arith.mulf %225, %224 : vector<2x128xf32>
    %cst_121 = arith.constant -1.45315206 : f32
    %227 = vector.broadcast %cst_121 : f32 to vector<2x128xf32>
    %228 = arith.addf %226, %227 : vector<2x128xf32>
    %229 = arith.mulf %228, %224 : vector<2x128xf32>
    %cst_122 = arith.constant 1.42141378 : f32
    %230 = vector.broadcast %cst_122 : f32 to vector<2x128xf32>
    %231 = arith.addf %229, %230 : vector<2x128xf32>
    %232 = arith.mulf %231, %224 : vector<2x128xf32>
    %cst_123 = arith.constant -0.284496725 : f32
    %233 = vector.broadcast %cst_123 : f32 to vector<2x128xf32>
    %234 = arith.addf %232, %233 : vector<2x128xf32>
    %235 = arith.mulf %234, %224 : vector<2x128xf32>
    %cst_124 = arith.constant 0.254829586 : f32
    %236 = vector.broadcast %cst_124 : f32 to vector<2x128xf32>
    %237 = arith.addf %235, %236 : vector<2x128xf32>
    %238 = arith.mulf %237, %224 : vector<2x128xf32>
    %cst_125 = arith.constant 0.000000e+00 : f32
    %239 = vector.broadcast %cst_125 : f32 to vector<2x128xf32>
    %240 = arith.subf %239, %218 : vector<2x128xf32>
    %241 = arith.mulf %240, %218 : vector<2x128xf32>
    %242 = math.exp %241 : vector<2x128xf32>
    %243 = arith.mulf %238, %242 : vector<2x128xf32>
    %cst_126 = arith.constant 1.000000e+00 : f32
    %244 = vector.broadcast %cst_126 : f32 to vector<2x128xf32>
    %245 = arith.subf %244, %243 : vector<2x128xf32>
    %cst_127 = arith.constant 0.000000e+00 : f32
    %246 = vector.broadcast %cst_127 : f32 to vector<2x128xf32>
    %247 = arith.cmpf oge, %217, %246 : vector<2x128xf32>
    %cst_128 = arith.constant 0.000000e+00 : f32
    %248 = vector.broadcast %cst_128 : f32 to vector<2x128xf32>
    %249 = arith.subf %248, %245 : vector<2x128xf32>
    %250 = arith.select %247, %245, %249 : vector<2x128xi1>, vector<2x128xf32>
    %cst_129 = arith.constant 1.000000e+00 : f32
    %251 = vector.broadcast %cst_129 : f32 to vector<2x128xf32>
    %252 = arith.addf %251, %250 : vector<2x128xf32>
    %253 = arith.mulf %215, %252 : vector<2x128xf32>
    %c1_130 = arith.constant 1 : index
    %c0_131 = arith.constant 0 : index
    %c256_132 = arith.constant 256 : index
    %254 = vector.load %arg2[%c1_130, %c0_131, %c256_132] : memref<2x32x512xf32, #tpu.memory_space<vmem>>, vector<1x32x128xf32>
    %255 = vector.shape_cast %254 : vector<1x32x128xf32> to vector<32x128xf32>
    %cst_133 = arith.constant dense<0.000000e+00> : vector<2x32xf32>
    %256 = tpu.matmul %253, %255, %cst_133 {dimension_numbers = #tpu.dot_dimension_numbers<[1], [1], [0], [0], [0, 0, 1, 0], [], []>} : vector<2x128xf32>, vector<32x128xf32>, vector<2x32xf32> -> vector<2x32xf32>
    %c1_134 = arith.constant 1 : index
    %c0_135 = arith.constant 0 : index
    %c384_136 = arith.constant 384 : index
    %257 = vector.load %arg3[%c1_134, %c0_135, %c384_136] : memref<2x1x512xf32, #tpu.memory_space<vmem>>, vector<1x1x32xf32>
    %258 = vector.shape_cast %257 : vector<1x1x32xf32> to vector<1x32xf32>
    %259 = vector.broadcast %258 : vector<1x32xf32> to vector<2x32xf32>
    %260 = arith.addf %256, %259 : vector<2x32xf32>
    %261 = arith.addf %206, %260 : vector<2x32xf32>
    %c1_137 = arith.constant 1 : index
    %c0_138 = arith.constant 0 : index
    %c192_139 = arith.constant 192 : index
    %262 = vector.load %arg3[%c1_137, %c0_138, %c192_139] : memref<2x1x512xf32, #tpu.memory_space<vmem>>, vector<1x1x32xf32>
    %263 = vector.shape_cast %262 : vector<1x1x32xf32> to vector<1x32xf32>
    %c1_140 = arith.constant 1 : index
    %c0_141 = arith.constant 0 : index
    %c224_142 = arith.constant 224 : index
    %264 = vector.load %arg3[%c1_140, %c0_141, %c224_142] : memref<2x1x512xf32, #tpu.memory_space<vmem>>, vector<1x1x32xf32>
    %265 = vector.shape_cast %264 : vector<1x1x32xf32> to vector<1x32xf32>
    %cst_143 = arith.constant dense<0.000000e+00> : vector<2xf32>
    %266 = vector.multi_reduction <add>, %261, %cst_143 [1] : vector<2x32xf32> to vector<2xf32>
    %267 = vector.shape_cast %266 : vector<2xf32> to vector<2x1xf32>
    %cst_144 = arith.constant 3.200000e+01 : f32
    %268 = vector.broadcast %cst_144 : f32 to vector<2x1xf32>
    %269 = arith.divf %267, %268 : vector<2x1xf32>
    %270 = vector.broadcast %269 : vector<2x1xf32> to vector<2x32xf32>
    %271 = arith.subf %261, %270 : vector<2x32xf32>
    %272 = arith.mulf %271, %271 : vector<2x32xf32>
    %cst_145 = arith.constant dense<0.000000e+00> : vector<2xf32>
    %273 = vector.multi_reduction <add>, %272, %cst_145 [1] : vector<2x32xf32> to vector<2xf32>
    %274 = vector.shape_cast %273 : vector<2xf32> to vector<2x1xf32>
    %cst_146 = arith.constant 3.200000e+01 : f32
    %275 = vector.broadcast %cst_146 : f32 to vector<2x1xf32>
    %276 = arith.divf %274, %275 : vector<2x1xf32>
    %cst_147 = arith.constant 9.99999974E-6 : f32
    %277 = vector.broadcast %cst_147 : f32 to vector<2x1xf32>
    %278 = arith.addf %276, %277 : vector<2x1xf32>
    %279 = math.rsqrt %278 : vector<2x1xf32>
    %280 = vector.broadcast %279 : vector<2x1xf32> to vector<2x32xf32>
    %281 = arith.mulf %271, %280 : vector<2x32xf32>
    %282 = vector.broadcast %263 : vector<1x32xf32> to vector<2x32xf32>
    %283 = arith.mulf %281, %282 : vector<2x32xf32>
    %284 = vector.broadcast %265 : vector<1x32xf32> to vector<2x32xf32>
    %285 = arith.addf %283, %284 : vector<2x32xf32>
    %c0_148 = arith.constant 0 : index
    %c0_149 = arith.constant 0 : index
    %c384_150 = arith.constant 384 : index
    %286 = vector.load %arg2[%c0_148, %c0_149, %c384_150] : memref<2x32x512xf32, #tpu.memory_space<vmem>>, vector<1x32x8xf32>
    %287 = vector.shape_cast %286 : vector<1x32x8xf32> to vector<32x8xf32>
    %cst_151 = arith.constant dense<0.000000e+00> : vector<2x8xf32>
    %288 = tpu.matmul %285, %287, %cst_151 {dimension_numbers = #tpu.dot_dimension_numbers<[1], [0], [0], [1], [0, 0, 1, 1], [], []>} : vector<2x32xf32>, vector<32x8xf32>, vector<2x8xf32> -> vector<2x8xf32>
    %c0_152 = arith.constant 0 : index
    %c0_153 = arith.constant 0 : index
    %c416 = arith.constant 416 : index
    %289 = vector.load %arg3[%c0_152, %c0_153, %c416] : memref<2x1x512xf32, #tpu.memory_space<vmem>>, vector<1x1x8xf32>
    %290 = vector.shape_cast %289 : vector<1x1x8xf32> to vector<1x8xf32>
    %291 = vector.broadcast %290 : vector<1x8xf32> to vector<2x8xf32>
    %292 = arith.addf %288, %291 : vector<2x8xf32>
    %c0_154 = arith.constant 0 : index
    %c0_155 = arith.constant 0 : index
    %293 = vector.load %arg5[%c0_154, %c0_155] : memref<2x8xf32, #tpu.memory_space<vmem>>, vector<2x8xf32>
    tpu.vector_store %arg5[%c0_154, %c0_155], %292 {strides = array<i32>} : memref<2x8xf32, #tpu.memory_space<vmem>>, vector<2x8xf32>,
    return
  }
  func.func @transform_0(%arg0: i32) -> (i32, i32) {
    %c0_i32 = arith.constant 0 : i32
    %c0_i32_0 = arith.constant 0 : i32
    %c0_i32_1 = arith.constant 0 : i32
    return %c0_i32, %c0_i32_0 : i32, i32
  }
  func.func @transform_1(%arg0: i32) -> (i32, i32, i32) {
    %c0_i32 = arith.constant 0 : i32
    %c0_i32_0 = arith.constant 0 : i32
    %c0_i32_1 = arith.constant 0 : i32
    %c0_i32_2 = arith.constant 0 : i32
    return %c0_i32, %c0_i32_0, %c0_i32_1 : i32, i32, i32
  }
  func.func @transform_2(%arg0: i32) -> (i32, i32, i32) {
    %c0_i32 = arith.constant 0 : i32
    %c0_i32_0 = arith.constant 0 : i32
    %c0_i32_1 = arith.constant 0 : i32
    %c0_i32_2 = arith.constant 0 : i32
    return %c0_i32, %c0_i32_0, %c0_i32_1 : i32, i32, i32
  }
  func.func @transform_3(%arg0: i32) -> (i32, i32) {
    %c0_i32 = arith.constant 0 : i32
    %c0_i32_0 = arith.constant 0 : i32
    %c0_i32_1 = arith.constant 0 : i32
    return %c0_i32, %c0_i32_0 : i32, i32
  }
  func.func @transform_4(%arg0: i32) -> (i32, i32) {
    %c0_i32 = arith.constant 0 : i32
    %c0_i32_0 = arith.constant 0 : i32
    %c0_i32_1 = arith.constant 0 : i32
    return %c0_i32, %c0_i32_0 : i32, i32
  }
}

</mosaic_0001>

<llo_original>
// kernel: tpu_custom_call.1
$region0: #{tpu_custom_call.1}
  #allocation0 [shape = 'u32[]', space=smem, size = 0x4, offset = 0x4, fixed_abs, tag = 'smem constant byte address 0x4 - core index']
  #allocation1 [shape = 'u32[144,128]{1,0:T(1,128)}', space=vmem, size = 0x12000, scoped, tag = 'internal scratch']
  %s0 = inlined_call_operand.hbm [shape: f32[16,32], index: 0, kind: input, shape index: {}]
  %s1 = inlined_call_operand.hbm [shape: f32[2,32,512], index: 1, kind: input, shape index: {}]
  %s2 = inlined_call_operand.hbm [shape: f32[2,1,512], index: 2, kind: input, shape index: {}]
  %s3 = inlined_call_operand.hbm [shape: f32[248,128], index: 3, kind: input, shape index: {}]
  %s4 = inlined_call_operand.hbm [shape: f32[2,8], index: 4, kind: output, shape index: {}]
  %s5 = sld [smem:[#allocation0]]
  $region42: #{tpu_custom_call.1} parent=0
    _
  %s7 = ssub.s32 1, %s5
  %s8 = scalar_select 0, %s7, %s5
  $region1: #{tpu_custom_call.1} parent=0
    #allocation2 [shape = 'u8[8192]{0}', space=vmem, size = 0x2000, scoped, tag = 'input window, operand 0, single buffered']
    #allocation3 [shape = 's32[1]{0}', space=sflag, size = 0x4, scoped, tag = 'scoped memory for tpu_custom_call.1']
    #allocation4 [shape = 's32[1]{0}', space=sflag, size = 0x4, scoped, tag = 'scoped memory for tpu_custom_call.1']
    #allocation5 [shape = 'u8[131072]{0}', space=vmem, size = 0x20000, scoped, tag = 'input window, operand 1, single buffered']
    #allocation6 [shape = 's32[1]{0}', space=sflag, size = 0x4, scoped, tag = 'scoped memory for tpu_custom_call.1']
    #allocation7 [shape = 'u8[4096]{0}', space=vmem, size = 0x1000, scoped, tag = 'input window, operand 2, single buffered']
    #allocation8 [shape = 'u8[126976]{0}', space=vmem, size = 0x1f000, scoped, tag = 'input window, operand 3, single buffered']
    #allocation9 [shape = 's32[1]{0}', space=sflag, size = 0x4, scoped, tag = 'scoped memory for tpu_custom_call.1']
    #allocation10 [shape = 'u8[1024]{0}', space=vmem, size = 0x400, scoped, tag = 'output window, operand 0, single buffered']
    %9 = vsyncpa [#allocation3], 0
    %10 = vsyncpa [#allocation6], 0
    %11 = vsyncpa [#allocation9], 0
    %12 = vsyncpa [#allocation4], 0
    // Predicated region
    $region2: #{tpu_custom_call.1} parent=1 // pred_check
      _
    $region3: #{tpu_custom_call.1} parent=1 // pred_check_branch
      %14 = sbr.rel (0) target = $region5
    $region4: #{tpu_custom_call.1} parent=1 // pred_region
      %s16 = ssub.s32 256, 256
      %17 = vsyncadd [#allocation3], %s16
      %s18 = sshll.u32 [#allocation2], 4
      %s19 = int_to_ptr.vmem [resolvable:$true] %s18
      %24 = dma.hbm_to_vmem [thread:$0]  %s0, 256, %s19, [#allocation3], 128, 128, 8
    $region5: #{tpu_custom_call.1} parent=1 // pred_fallthru
      _
    // Predicated region
    $region6: #{tpu_custom_call.1} parent=1 // pred_check
      _
    $region7: #{tpu_custom_call.1} parent=1 // pred_check_branch
      %26 = sbr.rel (0) target = $region9
    $region8: #{tpu_custom_call.1} parent=1 // pred_region
      %s28 = ssub.s32 4096, 4096
      %29 = vsyncadd [#allocation6], %s28
      %s30 = sshll.u32 [#allocation5], 4
      %s31 = int_to_ptr.vmem [resolvable:$true] %s30
      %36 = dma.hbm_to_vmem [thread:$0]  %s1, 4096, %s31, [#allocation6], 512, 512, 32
    $region9: #{tpu_custom_call.1} parent=1 // pred_fallthru
      _
    // Predicated region
    $region10: #{tpu_custom_call.1} parent=1 // pred_check
      _
    $region11: #{tpu_custom_call.1} parent=1 // pred_check_branch
      %38 = sbr.rel (0) target = $region13
    $region12: #{tpu_custom_call.1} parent=1 // pred_region
      %s40 = ssub.s32 128, 128
      %41 = vsyncadd [#allocation6], %s40
      %s42 = sshll.u32 [#allocation7], 4
      %s43 = int_to_ptr.vmem [resolvable:$true] %s42
      %48 = dma.hbm_to_vmem [thread:$0]  %s2, 128, %s43, [#allocation6], 64, 64, 4
    $region13: #{tpu_custom_call.1} parent=1 // pred_fallthru
      _
    // Predicated region
    $region14: #{tpu_custom_call.1} parent=1 // pred_check
      _
    $region15: #{tpu_custom_call.1} parent=1 // pred_check_branch
      %50 = sbr.rel (0) target = $region17
    $region16: #{tpu_custom_call.1} parent=1 // pred_region
      %s52 = ssub.s32 3968, 3968
      %53 = vsyncadd [#allocation9], %s52
      %s54 = sshll.u32 [#allocation8], 4
      %s55 = int_to_ptr.vmem [resolvable:$true] %s54
      %60 = dma.hbm_to_vmem [thread:$0]  %s3, 3968, %s55, [#allocation9], 128, 128, 8
    $region17: #{tpu_custom_call.1} parent=1 // pred_fallthru
      _
    // Predicated region
    $region18: #{tpu_custom_call.1} parent=1 // pred_check
      _
    $region19: #{tpu_custom_call.1} parent=1 // pred_check_branch
      %62 = sbr.rel (0) target = $region21
    $region20: #{tpu_custom_call.1} parent=1 // pred_region
      %63 = dma.done [#allocation3], 256
    $region21: #{tpu_custom_call.1} parent=1 // pred_fallthru
      _
    // Predicated region
    $region22: #{tpu_custom_call.1} parent=1 // pred_check
      _
    $region23: #{tpu_custom_call.1} parent=1 // pred_check_branch
      %65 = sbr.rel (0) target = $region25
    $region24: #{tpu_custom_call.1} parent=1 // pred_region
      %66 = dma.done [#allocation6], 4096
    $region25: #{tpu_custom_call.1} parent=1 // pred_fallthru
      _
    // Predicated region
    $region26: #{tpu_custom_call.1} parent=1 // pred_check
      _
    $region27: #{tpu_custom_call.1} parent=1 // pred_check_branch
      %68 = sbr.rel (0) target = $region29
    $region28: #{tpu_custom_call.1} parent=1 // pred_region
      %69 = dma.done [#allocation6], 128
    $region29: #{tpu_custom_call.1} parent=1 // pred_fallthru
      _
    // Predicated region
    $region30: #{tpu_custom_call.1} parent=1 // pred_check
      _
    $region31: #{tpu_custom_call.1} parent=1 // pred_check_branch
      %71 = sbr.rel (0) target = $region33
    $region32: #{tpu_custom_call.1} parent=1 // pred_region
      %72 = dma.done [#allocation9], 3968
    $region33: #{tpu_custom_call.1} parent=1 // pred_fallthru
      _
    %v73 = vld [vmem:[#allocation2] sm:$0xff]
    %v74 = vld [vmem:[#allocation2 + $0x8] sm:$0xff]
    %v75 = vld [vmem:[#allocation8] sm:$0xff]
    %v76 = vld [vmem:[#allocation8 + $0x8] sm:$0xff]
    %v77 = vld [vmem:[#allocation8 + $0x10] sm:$0xff]
    %v78 = vld [vmem:[#allocation8 + $0x18] sm:$0xff]
    %v79 = vld [vmem:[#allocation8 + $0x20] sm:$0xff]
    %v80 = vld [vmem:[#allocation8 + $0x28] sm:$0xff]
    %v81 = vld [vmem:[#allocation8 + $0x30] sm:$0xff]
    %v82 = vld [vmem:[#allocation8 + $0x38] sm:$0xff]
    %v83 = vld [vmem:[#allocation8 + $0x40] sm:$0xff]
    %v84 = vld [vmem:[#allocation8 + $0x48] sm:$0xff]
    %v85 = vld [vmem:[#allocation8 + $0x50] sm:$0xff]
    %v86 = vld [vmem:[#allocation8 + $0x58] sm:$0xff]
    %v87 = vld [vmem:[#allocation8 + $0x60] sm:$0xff]
    %v88 = vld [vmem:[#allocation8 + $0x68] sm:$0xff]
    %v89 = vld [vmem:[#allocation8 + $0x70] sm:$0xff]
    %v90 = vld [vmem:[#allocation8 + $0x78] sm:$0xff]
    %v91 = vld [vmem:[#allocation8 + $0x80] sm:$0xff]
    %v92 = vld [vmem:[#allocation8 + $0x88] sm:$0xff]
    %v93 = vld [vmem:[#allocation8 + $0x90] sm:$0xff]
    %v94 = vld [vmem:[#allocation8 + $0x98] sm:$0xff]
    %v95 = vld [vmem:[#allocation8 + $0xa0] sm:$0xff]
    %v96 = vld [vmem:[#allocation8 + $0xa8] sm:$0xff]
    %v97 = vld [vmem:[#allocation8 + $0xb0] sm:$0xff]
    %v98 = vld [vmem:[#allocation8 + $0xb8] sm:$0xff]
    %v99 = vld [vmem:[#allocation8 + $0xc0] sm:$0xff]
    %v100 = vld [vmem:[#allocation8 + $0xc8] sm:$0xff]
    %v101 = vld [vmem:[#allocation5] sm:$0xff]
    %v102 = vld [vmem:[#allocation5 + $0x20] sm:$0xff]
    %v103 = vld [vmem:[#allocation5 + $0x40] sm:$0xff]
    %v104 = vld [vmem:[#allocation5 + $0x60] sm:$0xff]
    %v105 = vld [vmem:[#allocation7] sm:$0x1]
    %v107 = vlaneseq
    %v108 = vshrl.u32 %v107, 7
    %v109 = vsub.s32 0, %v108
    %v110 = vrot.slane %v105, %v109
    %vm112 = vcmask 261120
    %v114 = vsel %vm112, %v73, 0
    %v117 = vsel %vm112, %v74, 0
    %119 = vmatprep.subr.mxu0 0.0
    %120 = vmatpush1.msra.mxu0 0.0
    %121 = vmatprep.subr.mxu0 0.0
    %122 = vmatpush1.msra.mxu0 0.0
    %123 = vmatprep.subr.mxu0 0.0
    %124 = vmatpush1.msra.mxu0 0.0
    %125 = vmatprep.subr.mxu0 0.0
    %126 = vmatpush1.msra.mxu0 0.0
    %127 = vmatprep.subr.mxu0 0.0
    %128 = vmatpush1.msra.mxu0 0.0
    %129 = vmatprep.subr.mxu0 0.0
    %130 = vmatpush1.msra.mxu0 0.0
    %131 = vmatprep.subr.mxu0 0.0
    %132 = vmatpush1.msra.mxu0 0.0
    %133 = vmatprep.subr.mxu0 0.0
    %134 = vmatpush1.msra.mxu0 0.0
    %135 = vmatprep.subr.mxu0 0.0
    %136 = vmatpush1.msra.mxu0 0.0
    %137 = vmatprep.subr.mxu0 0.0
    %138 = vmatpush1.msra.mxu0 0.0
    %139 = vmatprep.subr.mxu0 0.0
    %140 = vmatpush1.msra.mxu0 0.0
    %141 = vmatprep.subr.mxu0 0.0
    %142 = vmatpush1.msra.mxu0 0.0
    %143 = vmatprep.subr.mxu0 0.0
    %144 = vmatpush1.msra.mxu0 %v104
    %145 = vmatprep.subr.mxu0 0.0
    %146 = vmatpush1.msra.mxu0 %v103
    %147 = vmatprep.subr.mxu0 0.0
    %148 = vmatpush1.msra.mxu0 %v102
    %149 = vmatprep.subr.mxu0 0.0
    %150 = vmatpush1.msra.mxu0 %v101
    %151 = vmatprep.subr.mxu0 0.0
    %152 = vmatpush2.msra.mxu0 0.0
    %153 = vmatprep.subr.mxu0 0.0
    %154 = vmatpush2.msra.mxu0 0.0
    %155 = vmatprep.subr.mxu0 0.0
    %156 = vmatpush2.msra.mxu0 0.0
    %157 = vmatprep.subr.mxu0 0.0
    %158 = vmatpush2.msra.mxu0 0.0
    %159 = vmatprep.subr.mxu0 0.0
    %160 = vmatpush2.msra.mxu0 0.0
    %161 = vmatprep.subr.mxu0 0.0
    %162 = vmatpush2.msra.mxu0 0.0
    %163 = vmatprep.subr.mxu0 0.0
    %164 = vmatpush2.msra.mxu0 0.0
    %165 = vmatprep.subr.mxu0 0.0
    %166 = vmatpush2.msra.mxu0 0.0
    %167 = vmatprep.subr.mxu0 0.0
    %168 = vmatpush2.msra.mxu0 0.0
    %169 = vmatprep.subr.mxu0 0.0
    %170 = vmatpush2.msra.mxu0 0.0
    %171 = vmatprep.subr.mxu0 0.0
    %172 = vmatpush2.msra.mxu0 0.0
    %173 = vmatprep.subr.mxu0 0.0
    %174 = vmatpush2.msra.mxu0 0.0
    %175 = vmatprep.subr.mxu0 0.0
    %176 = vmatpush2.msra.mxu0 0.0
    %177 = vmatprep.subr.mxu0 0.0
    %178 = vmatpush2.msra.mxu0 0.0
    %179 = vmatprep.subr.mxu0 0.0
    %180 = vmatpush2.msra.mxu0 0.0
    %181 = vmatprep.subr.mxu0 0.0
    %182 = vmatpush2.msra.mxu0 0.0
    %183 = vmatprep.mubr.f32.mxu0 0.0
    %184 = vmatmul.mubr.f32.gmra.mxu0 %v114
    %v185 = vpop.f32.mrf.mxu0
    %v186 = vadd.f32 %v110, %v185
    %v187 = vpop.f32.mrf.mxu0
    %188 = vmatprep.mubr.f32.mxu0 0.0
    %189 = vmatmul.mubr.f32.gmra.mxu0 %v117
    %v190 = vpop.f32.mrf.mxu0
    %v191 = vadd.f32 %v110, %v190
    %v192 = vpop.f32.mrf.mxu0
    %193 = vdwg.mxu0
    %vm194 = vcmask 130048
    %v196 = vsel %vm194, %v75, 0
    %v199 = vsel %vm194, %v76, 0
    %v202 = vsel %vm194, %v77, 0
    %v205 = vsel %vm194, %v78, 0
    %v208 = vsel %vm194, %v79, 0
    %v211 = vsel %vm194, %v80, 0
    %v214 = vsel %vm194, %v81, 0
    %v217 = vsel %vm194, %v82, 0
    %219 = vmatprep.subr.mxu0 0.0
    %220 = vmatpush1.msra.mxu0 0.0
    %221 = vmatprep.subr.mxu0 0.0
    %222 = vmatpush1.msra.mxu0 0.0
    %223 = vmatprep.subr.mxu0 0.0
    %224 = vmatpush1.msra.mxu0 0.0
    %225 = vmatprep.subr.mxu0 0.0
    %226 = vmatpush1.msra.mxu0 0.0
    %227 = vmatprep.subr.mxu0 0.0
    %228 = vmatpush1.msra.mxu0 0.0
    %229 = vmatprep.subr.mxu0 0.0
    %230 = vmatpush1.msra.mxu0 0.0
    %231 = vmatprep.subr.mxu0 0.0
    %232 = vmatpush1.msra.mxu0 0.0
    %233 = vmatprep.subr.mxu0 0.0
    %234 = vmatpush1.msra.mxu0 0.0
    %235 = vmatprep.subr.mxu0 0.0
    %236 = vmatpush1.msra.mxu0 0.0
    %237 = vmatprep.subr.mxu0 0.0
    %238 = vmatpush1.msra.mxu0 0.0
    %239 = vmatprep.subr.mxu0 0.0
    %240 = vmatpush1.msra.mxu0 0.0
    %241 = vmatprep.subr.mxu0 0.0
    %242 = vmatpush1.msra.mxu0 0.0
    %243 = vmatprep.subr.mxu0 0.0
    %244 = vmatpush1.msra.mxu0 0.0
    %245 = vmatprep.subr.mxu0 0.0
    %246 = vmatpush1.msra.mxu0 0.0
    %247 = vmatprep.subr.mxu0 0.0
    %248 = vmatpush1.msra.mxu0 %v191
    %249 = vmatprep.subr.mxu0 0.0
    %250 = vmatpush1.msra.mxu0 %v186
    %251 = vmatprep.subr.mxu0 0.0
    %252 = vmatpush2.msra.mxu0 0.0
    %253 = vmatprep.subr.mxu0 0.0
    %254 = vmatpush2.msra.mxu0 0.0
    %255 = vmatprep.subr.mxu0 0.0
    %256 = vmatpush2.msra.mxu0 0.0
    %257 = vmatprep.subr.mxu0 0.0
    %258 = vmatpush2.msra.mxu0 0.0
    %259 = vmatprep.subr.mxu0 0.0
    %260 = vmatpush2.msra.mxu0 0.0
    %261 = vmatprep.subr.mxu0 0.0
    %262 = vmatpush2.msra.mxu0 0.0
    %263 = vmatprep.subr.mxu0 0.0
    %264 = vmatpush2.msra.mxu0 0.0
    %265 = vmatprep.subr.mxu0 0.0
    %266 = vmatpush2.msra.mxu0 0.0
    %267 = vmatprep.subr.mxu0 0.0
    %268 = vmatpush2.msra.mxu0 0.0
    %269 = vmatprep.subr.mxu0 0.0
    %270 = vmatpush2.msra.mxu0 0.0
    %271 = vmatprep.subr.mxu0 0.0
    %272 = vmatpush2.msra.mxu0 0.0
    %273 = vmatprep.subr.mxu0 0.0
    %274 = vmatpush2.msra.mxu0 0.0
    %275 = vmatprep.subr.mxu0 0.0
    %276 = vmatpush2.msra.mxu0 0.0
    %277 = vmatprep.subr.mxu0 0.0
    %278 = vmatpush2.msra.mxu0 0.0
    %279 = vmatprep.subr.mxu0 0.0
    %280 = vmatpush2.msra.mxu0 0.0
    %281 = vmatprep.subr.mxu0 0.0
    %282 = vmatpush2.msra.mxu0 0.0
    %283 = vmatprep.mubr.f32.mxu0 0.0
    %284 = vmatmul.mubr.f32.gmra.mxu0 %v196
    %v285 = vpop.f32.mrf.mxu0
    %v286 = vadd.f32 0.0, %v285
    %v287 = vpop.f32.mrf.mxu0
    %288 = vmatprep.mubr.f32.mxu0 0.0
    %289 = vmatmul.mubr.f32.gmra.mxu0 %v199
    %v290 = vpop.f32.mrf.mxu0
    %v291 = vadd.f32 0.0, %v290
    %v292 = vpop.f32.mrf.mxu0
    %293 = vmatprep.mubr.f32.mxu0 0.0
    %294 = vmatmul.mubr.f32.gmra.mxu0 %v202
    %v295 = vpop.f32.mrf.mxu0
    %v296 = vadd.f32 0.0, %v295
    %v297 = vpop.f32.mrf.mxu0
    %298 = vmatprep.mubr.f32.mxu0 0.0
    %299 = vmatmul.mubr.f32.gmra.mxu0 %v205
    %v300 = vpop.f32.mrf.mxu0
    %v301 = vadd.f32 0.0, %v300
    %v302 = vpop.f32.mrf.mxu0
    %303 = vmatprep.mubr.f32.mxu0 0.0
    %304 = vmatmul.mubr.f32.gmra.mxu0 %v208
    %v305 = vpop.f32.mrf.mxu0
    %v306 = vadd.f32 0.0, %v305
    %v307 = vpop.f32.mrf.mxu0
    %308 = vmatprep.mubr.f32.mxu0 0.0
    %309 = vmatmul.mubr.f32.gmra.mxu0 %v211
    %v310 = vpop.f32.mrf.mxu0
    %v311 = vadd.f32 0.0, %v310
    %v312 = vpop.f32.mrf.mxu0
    %313 = vmatprep.mubr.f32.mxu0 0.0
    %314 = vmatmul.mubr.f32.gmra.mxu0 %v214
    %v315 = vpop.f32.mrf.mxu0
    %v316 = vadd.f32 0.0, %v315
    %v317 = vpop.f32.mrf.mxu0
    %318 = vmatprep.mubr.f32.mxu0 0.0
    %319 = vmatmul.mubr.f32.gmra.mxu0 %v217
    %v320 = vpop.f32.mrf.mxu0
    %v321 = vadd.f32 0.0, %v320
    %v322 = vpop.f32.mrf.mxu0
    %323 = vdwg.mxu0
    %v324 = vmul.f32 %v286, %v83
    %v325 = vmul.f32 %v291, %v84
    %v326 = vmul.f32 %v296, %v85
    %v327 = vmul.f32 %v301, %v86
    %v328 = vmul.f32 %v306, %v87
    %v329 = vmul.f32 %v311, %v88
    %v330 = vmul.f32 %v316, %v89
    %v331 = vmul.f32 %v321, %v90
    %334 = vrot.lane.b32.xlu0 %v186, 96
    %v335 = vpop.permute.xlu0 %334
    %336 = vrot.lane.b32.xlu0 %v191, 96
    %v337 = vpop.permute.xlu0 %336
    %v339 = vsel %vm112, %v324, 0
    %v342 = vsel %vm112, %v325, 0
    %v345 = vsel %vm112, %v326, 0
    %v348 = vsel %vm112, %v327, 0
    %v351 = vsel %vm112, %v328, 0
    %v354 = vsel %vm112, %v329, 0
    %v357 = vsel %vm112, %v330, 0
    %v360 = vsel %vm112, %v331, 0
    %v362 = vsel %vm112, %v335, 0
    %v364 = vsel %vm112, %v337, 0
    %366 = vmatprep.subr.mxu0 0.0
    %367 = vmatpush1.xpose.msra.mxu0 0.0
    %368 = vmatprep.subr.mxu0 0.0
    %369 = vmatpush1.xpose.msra.mxu0 0.0
    %370 = vmatprep.subr.mxu0 0.0
    %371 = vmatpush1.xpose.msra.mxu0 0.0
    %372 = vmatprep.subr.mxu0 0.0
    %373 = vmatpush1.xpose.msra.mxu0 0.0
    %374 = vmatprep.subr.mxu0 0.0
    %375 = vmatpush1.xpose.msra.mxu0 0.0
    %376 = vmatprep.subr.mxu0 0.0
    %377 = vmatpush1.xpose.msra.mxu0 0.0
    %378 = vmatprep.subr.mxu0 0.0
    %379 = vmatpush1.xpose.msra.mxu0 0.0
    %380 = vmatprep.subr.mxu0 0.0
    %381 = vmatpush1.xpose.msra.mxu0 0.0
    %382 = vmatprep.subr.mxu0 0.0
    %383 = vmatpush1.xpose.msra.mxu0 0.0
    %384 = vmatprep.subr.mxu0 0.0
    %385 = vmatpush1.xpose.msra.mxu0 0.0
    %386 = vmatprep.subr.mxu0 0.0
    %387 = vmatpush1.xpose.msra.mxu0 0.0
    %388 = vmatprep.subr.mxu0 0.0
    %389 = vmatpush1.xpose.msra.mxu0 0.0
    %390 = vmatprep.subr.mxu0 0.0
    %391 = vmatpush1.xpose.msra.mxu0 0.0
    %392 = vmatprep.subr.mxu0 0.0
    %393 = vmatpush1.xpose.msra.mxu0 0.0
    %394 = vmatprep.subr.mxu0 0.0
    %395 = vmatpush1.xpose.msra.mxu0 %v364
    %396 = vmatprep.subr.mxu0 0.0
    %397 = vmatpush1.xpose.msra.mxu0 %v362
    %398 = vmatprep.subr.mxu0 0.0
    %399 = vmatpush2.xpose.msra.mxu0 0.0
    %400 = vmatprep.subr.mxu0 0.0
    %401 = vmatpush2.xpose.msra.mxu0 0.0
    %402 = vmatprep.subr.mxu0 0.0
    %403 = vmatpush2.xpose.msra.mxu0 0.0
    %404 = vmatprep.subr.mxu0 0.0
    %405 = vmatpush2.xpose.msra.mxu0 0.0
    %406 = vmatprep.subr.mxu0 0.0
    %407 = vmatpush2.xpose.msra.mxu0 0.0
    %408 = vmatprep.subr.mxu0 0.0
    %409 = vmatpush2.xpose.msra.mxu0 0.0
    %410 = vmatprep.subr.mxu0 0.0
    %411 = vmatpush2.xpose.msra.mxu0 0.0
    %412 = vmatprep.subr.mxu0 0.0
    %413 = vmatpush2.xpose.msra.mxu0 0.0
    %414 = vmatprep.subr.mxu0 0.0
    %415 = vmatpush2.xpose.msra.mxu0 0.0
    %416 = vmatprep.subr.mxu0 0.0
    %417 = vmatpush2.xpose.msra.mxu0 0.0
    %418 = vmatprep.subr.mxu0 0.0
    %419 = vmatpush2.xpose.msra.mxu0 0.0
    %420 = vmatprep.subr.mxu0 0.0
    %421 = vmatpush2.xpose.msra.mxu0 0.0
    %422 = vmatprep.subr.mxu0 0.0
    %423 = vmatpush2.xpose.msra.mxu0 0.0
    %424 = vmatprep.subr.mxu0 0.0
    %425 = vmatpush2.xpose.msra.mxu0 0.0
    %426 = vmatprep.subr.mxu0 0.0
    %427 = vmatpush2.xpose.msra.mxu0 0.0
    %428 = vmatprep.subr.mxu0 0.0
    %429 = vmatpush2.xpose.msra.mxu0 0.0
    %430 = vmatprep.mubr.f32.mxu0 0.0
    %431 = vmatmul.mubr.f32.gmra.mxu0 %v339
    %v432 = vpop.f32.mrf.mxu0
    %v433 = vadd.f32 0.0, %v432
    %v434 = vpop.f32.mrf.mxu0
    %435 = vmatprep.mubr.f32.mxu0 0.0
    %436 = vmatmul.mubr.f32.gmra.mxu0 %v342
    %v437 = vpop.f32.mrf.mxu0
    %v438 = vadd.f32 0.0, %v437
    %v439 = vpop.f32.mrf.mxu0
    %440 = vmatprep.mubr.f32.mxu0 0.0
    %441 = vmatmul.mubr.f32.gmra.mxu0 %v345
    %v442 = vpop.f32.mrf.mxu0
    %v443 = vadd.f32 0.0, %v442
    %v444 = vpop.f32.mrf.mxu0
    %445 = vmatprep.mubr.f32.mxu0 0.0
    %446 = vmatmul.mubr.f32.gmra.mxu0 %v348
    %v447 = vpop.f32.mrf.mxu0
    %v448 = vadd.f32 0.0, %v447
    %v449 = vpop.f32.mrf.mxu0
    %450 = vmatprep.mubr.f32.mxu0 0.0
    %451 = vmatmul.mubr.f32.gmra.mxu0 %v351
    %v452 = vpop.f32.mrf.mxu0
    %v453 = vadd.f32 0.0, %v452
    %v454 = vpop.f32.mrf.mxu0
    %455 = vmatprep.mubr.f32.mxu0 0.0
    %456 = vmatmul.mubr.f32.gmra.mxu0 %v354
    %v457 = vpop.f32.mrf.mxu0
    %v458 = vadd.f32 0.0, %v457
    %v459 = vpop.f32.mrf.mxu0
    %460 = vmatprep.mubr.f32.mxu0 0.0
    %461 = vmatmul.mubr.f32.gmra.mxu0 %v357
    %v462 = vpop.f32.mrf.mxu0
    %v463 = vadd.f32 0.0, %v462
    %v464 = vpop.f32.mrf.mxu0
    %465 = vmatprep.mubr.f32.mxu0 0.0
    %466 = vmatmul.mubr.f32.gmra.mxu0 %v360
    %v467 = vpop.f32.mrf.mxu0
    %v468 = vadd.f32 0.0, %v467
    %v469 = vpop.f32.mrf.mxu0
    %470 = vdwg.mxu0
    %v471 = vsel %vm194, %v433, -inf
    %472 = vmax.xlane.f32.xlu0 %v471
    %v473 = vpop.xlane.xlu0 %472
    %v474 = vsel %vm194, %v438, -inf
    %475 = vmax.xlane.f32.xlu0 %v474
    %v476 = vpop.xlane.xlu0 %475
    %v477 = vsel %vm194, %v443, -inf
    %478 = vmax.xlane.f32.xlu0 %v477
    %v479 = vpop.xlane.xlu0 %478
    %v480 = vsel %vm194, %v448, -inf
    %481 = vmax.xlane.f32.xlu0 %v480
    %v482 = vpop.xlane.xlu0 %481
    %v483 = vsel %vm194, %v453, -inf
    %484 = vmax.xlane.f32.xlu0 %v483
    %v485 = vpop.xlane.xlu0 %484
    %v486 = vsel %vm194, %v458, -inf
    %487 = vmax.xlane.f32.xlu0 %v486
    %v488 = vpop.xlane.xlu0 %487
    %v489 = vsel %vm194, %v463, -inf
    %490 = vmax.xlane.f32.xlu0 %v489
    %v491 = vpop.xlane.xlu0 %490
    %v492 = vsel %vm194, %v468, -inf
    %493 = vmax.xlane.f32.xlu0 %v492
    %v494 = vpop.xlane.xlu0 %493
    %v495 = vsub.f32 %v433, %v473
    %v496 = vsub.f32 %v438, %v476
    %v497 = vsub.f32 %v443, %v479
    %v498 = vsub.f32 %v448, %v482
    %v499 = vsub.f32 %v453, %v485
    %v500 = vsub.f32 %v458, %v488
    %v501 = vsub.f32 %v463, %v491
    %v502 = vsub.f32 %v468, %v494
    %v503 = vmul.f32 %v495, 1.442695
    %v504 = vpow.pop %v503
    %v505 = vmul.f32 %v496, 1.442695
    %v506 = vpow.pop %v505
    %v507 = vmul.f32 %v497, 1.442695
    %v508 = vpow.pop %v507
    %v509 = vmul.f32 %v498, 1.442695
    %v510 = vpow.pop %v509
    %v511 = vmul.f32 %v499, 1.442695
    %v512 = vpow.pop %v511
    %v513 = vmul.f32 %v500, 1.442695
    %v514 = vpow.pop %v513
    %v515 = vmul.f32 %v501, 1.442695
    %v516 = vpow.pop %v515
    %v517 = vmul.f32 %v502, 1.442695
    %v518 = vpow.pop %v517
    %v519 = vmul.f32 %v504, %v91
    %v520 = vmul.f32 %v506, %v92
    %v521 = vmul.f32 %v508, %v93
    %v522 = vmul.f32 %v510, %v94
    %v523 = vmul.f32 %v512, %v95
    %v524 = vmul.f32 %v514, %v96
    %v525 = vmul.f32 %v516, %v97
    %v526 = vmul.f32 %v518, %v98
    %v527 = vsel %vm194, %v519, 0.0
    %528 = vadd.xlane.f32.xlu0 %v527
    %v529 = vpop.xlane.xlu0 %528
    %v530 = vsel %vm194, %v520, 0.0
    %531 = vadd.xlane.f32.xlu0 %v530
    %v532 = vpop.xlane.xlu0 %531
    %v533 = vsel %vm194, %v521, 0.0
    %534 = vadd.xlane.f32.xlu0 %v533
    %v535 = vpop.xlane.xlu0 %534
    %v536 = vsel %vm194, %v522, 0.0
    %537 = vadd.xlane.f32.xlu0 %v536
    %v538 = vpop.xlane.xlu0 %537
    %v539 = vsel %vm194, %v523, 0.0
    %540 = vadd.xlane.f32.xlu0 %v539
    %v541 = vpop.xlane.xlu0 %540
    %v542 = vsel %vm194, %v524, 0.0
    %543 = vadd.xlane.f32.xlu0 %v542
    %v544 = vpop.xlane.xlu0 %543
    %v545 = vsel %vm194, %v525, 0.0
    %546 = vadd.xlane.f32.xlu0 %v545
    %v547 = vpop.xlane.xlu0 %546
    %v548 = vsel %vm194, %v526, 0.0
    %549 = vadd.xlane.f32.xlu0 %v548
    %v550 = vpop.xlane.xlu0 %549
    %v551 = vrcp.pop %v529
    %v552 = vrcp.pop %v532
    %v553 = vrcp.pop %v535
    %v554 = vrcp.pop %v538
    %v555 = vrcp.pop %v541
    %v556 = vrcp.pop %v544
    %v557 = vrcp.pop %v547
    %v558 = vrcp.pop %v550
    %v559 = vmul.f32 %v519, %v551
    %v560 = vmul.f32 %v520, %v552
    %v561 = vmul.f32 %v521, %v553
    %v562 = vmul.f32 %v522, %v554
    %v563 = vmul.f32 %v523, %v555
    %v564 = vmul.f32 %v524, %v556
    %v565 = vmul.f32 %v525, %v557
    %v566 = vmul.f32 %v526, %v558
    %567 = vrot.lane.b32.xlu0 %v186, 64
    %v568 = vpop.permute.xlu0 %567
    %569 = vrot.lane.b32.xlu0 %v191, 64
    %v570 = vpop.permute.xlu0 %569
    %v574 = vsel %vm194, %v559, 0
    %v577 = vsel %vm194, %v560, 0
    %v580 = vsel %vm194, %v561, 0
    %v583 = vsel %vm194, %v562, 0
    %v586 = vsel %vm194, %v563, 0
    %v589 = vsel %vm194, %v564, 0
    %v592 = vsel %vm194, %v565, 0
    %v595 = vsel %vm194, %v566, 0
    %597 = vmatprep.subr.mxu0 0.0
    %598 = vmatpush1.msra.mxu0 0.0
    %599 = vmatprep.subr.mxu0 0.0
    %600 = vmatpush1.msra.mxu0 0.0
    %601 = vmatprep.subr.mxu0 0.0
    %602 = vmatpush1.msra.mxu0 0.0
    %603 = vmatprep.subr.mxu0 0.0
    %604 = vmatpush1.msra.mxu0 0.0
    %605 = vmatprep.subr.mxu0 0.0
    %606 = vmatpush1.msra.mxu0 0.0
    %607 = vmatprep.subr.mxu0 0.0
    %608 = vmatpush1.msra.mxu0 0.0
    %609 = vmatprep.subr.mxu0 0.0
    %610 = vmatpush1.msra.mxu0 0.0
    %611 = vmatprep.subr.mxu0 0.0
    %612 = vmatpush1.msra.mxu0 0.0
    %613 = vmatprep.subr.mxu0 0.0
    %614 = vmatpush1.msra.mxu0 0.0
    %615 = vmatprep.subr.mxu0 0.0
    %616 = vmatpush1.msra.mxu0 0.0
    %617 = vmatprep.subr.mxu0 0.0
    %618 = vmatpush1.msra.mxu0 0.0
    %619 = vmatprep.subr.mxu0 0.0
    %620 = vmatpush1.msra.mxu0 0.0
    %621 = vmatprep.subr.mxu0 0.0
    %622 = vmatpush1.msra.mxu0 0.0
    %623 = vmatprep.subr.mxu0 0.0
    %624 = vmatpush1.msra.mxu0 0.0
    %625 = vmatprep.subr.mxu0 0.0
    %626 = vmatpush1.msra.mxu0 %v570
    %627 = vmatprep.subr.mxu0 0.0
    %628 = vmatpush1.msra.mxu0 %v568
    %629 = vmatprep.subr.mxu0 0.0
    %630 = vmatpush2.msra.mxu0 0.0
    %631 = vmatprep.subr.mxu0 0.0
    %632 = vmatpush2.msra.mxu0 0.0
    %633 = vmatprep.subr.mxu0 0.0
    %634 = vmatpush2.msra.mxu0 0.0
    %635 = vmatprep.subr.mxu0 0.0
    %636 = vmatpush2.msra.mxu0 0.0
    %637 = vmatprep.subr.mxu0 0.0
    %638 = vmatpush2.msra.mxu0 0.0
    %639 = vmatprep.subr.mxu0 0.0
    %640 = vmatpush2.msra.mxu0 0.0
    %641 = vmatprep.subr.mxu0 0.0
    %642 = vmatpush2.msra.mxu0 0.0
    %643 = vmatprep.subr.mxu0 0.0
    %644 = vmatpush2.msra.mxu0 0.0
    %645 = vmatprep.subr.mxu0 0.0
    %646 = vmatpush2.msra.mxu0 0.0
    %647 = vmatprep.subr.mxu0 0.0
    %648 = vmatpush2.msra.mxu0 0.0
    %649 = vmatprep.subr.mxu0 0.0
    %650 = vmatpush2.msra.mxu0 0.0
    %651 = vmatprep.subr.mxu0 0.0
    %652 = vmatpush2.msra.mxu0 0.0
    %653 = vmatprep.subr.mxu0 0.0
    %654 = vmatpush2.msra.mxu0 0.0
    %655 = vmatprep.subr.mxu0 0.0
    %656 = vmatpush2.msra.mxu0 0.0
    %657 = vmatprep.subr.mxu0 0.0
    %658 = vmatpush2.msra.mxu0 0.0
    %659 = vmatprep.subr.mxu0 0.0
    %660 = vmatpush2.msra.mxu0 0.0
    %661 = vmatprep.mubr.f32.mxu0 0.0
    %662 = vmatmul.mubr.f32.gmra.mxu0 %v574
    %v663 = vpop.f32.mrf.mxu0
    %v664 = vadd.f32 0.0, %v663
    %v665 = vpop.f32.mrf.mxu0
    %666 = vmatprep.mubr.f32.mxu0 0.0
    %667 = vmatmul.mubr.f32.gmra.mxu0 %v577
    %v668 = vpop.f32.mrf.mxu0
    %v669 = vadd.f32 0.0, %v668
    %v670 = vpop.f32.mrf.mxu0
    %671 = vmatprep.mubr.f32.mxu0 0.0
    %672 = vmatmul.mubr.f32.gmra.mxu0 %v580
    %v673 = vpop.f32.mrf.mxu0
    %v674 = vadd.f32 0.0, %v673
    %v675 = vpop.f32.mrf.mxu0
    %676 = vmatprep.mubr.f32.mxu0 0.0
    %677 = vmatmul.mubr.f32.gmra.mxu0 %v583
    %v678 = vpop.f32.mrf.mxu0
    %v679 = vadd.f32 0.0, %v678
    %v680 = vpop.f32.mrf.mxu0
    %681 = vmatprep.mubr.f32.mxu0 0.0
    %682 = vmatmul.mubr.f32.gmra.mxu0 %v586
    %v683 = vpop.f32.mrf.mxu0
    %v684 = vadd.f32 0.0, %v683
    %v685 = vpop.f32.mrf.mxu0
    %686 = vmatprep.mubr.f32.mxu0 0.0
    %687 = vmatmul.mubr.f32.gmra.mxu0 %v589
    %v688 = vpop.f32.mrf.mxu0
    %v689 = vadd.f32 0.0, %v688
    %v690 = vpop.f32.mrf.mxu0
    %691 = vmatprep.mubr.f32.mxu0 0.0
    %692 = vmatmul.mubr.f32.gmra.mxu0 %v592
    %v693 = vpop.f32.mrf.mxu0
    %v694 = vadd.f32 0.0, %v693
    %v695 = vpop.f32.mrf.mxu0
    %696 = vmatprep.mubr.f32.mxu0 0.0
    %697 = vmatmul.mubr.f32.gmra.mxu0 %v595
    %v698 = vpop.f32.mrf.mxu0
    %v699 = vadd.f32 0.0, %v698
    %v700 = vpop.f32.mrf.mxu0
    %701 = vdwg.mxu0
    %v702 = vmul.f32 %v664, %v83
    %v703 = vmul.f32 %v669, %v84
    %v704 = vmul.f32 %v674, %v85
    %v705 = vmul.f32 %v679, %v86
    %v706 = vmul.f32 %v684, %v87
    %v707 = vmul.f32 %v689, %v88
    %v708 = vmul.f32 %v694, %v89
    %v709 = vmul.f32 %v699, %v90
    %vm710 = vcmask 523264
    %v712 = vsel %vm710, %v99, 0
    %v715 = vsel %vm710, %v100, 0
    %717 = vmatprep.subr.mxu0 0.0
    %718 = vmatpush1.msra.mxu0 0.0
    %719 = vmatprep.subr.mxu0 0.0
    %720 = vmatpush1.msra.mxu0 0.0
    %721 = vmatprep.subr.mxu0 0.0
    %722 = vmatpush1.msra.mxu0 0.0
    %723 = vmatprep.subr.mxu0 0.0
    %724 = vmatpush1.msra.mxu0 0.0
    %725 = vmatprep.subr.mxu0 0.0
    %726 = vmatpush1.msra.mxu0 0.0
    %727 = vmatprep.subr.mxu0 0.0
    %728 = vmatpush1.msra.mxu0 0.0
    %729 = vmatprep.subr.mxu0 0.0
    %730 = vmatpush1.msra.mxu0 0.0
    %731 = vmatprep.subr.mxu0 0.0
    %732 = vmatpush1.msra.mxu0 0.0
    %733 = vmatprep.subr.mxu0 0.0
    %734 = vmatpush1.msra.mxu0 %v709
    %735 = vmatprep.subr.mxu0 0.0
    %736 = vmatpush1.msra.mxu0 %v708
    %737 = vmatprep.subr.mxu0 0.0
    %738 = vmatpush1.msra.mxu0 %v707
    %739 = vmatprep.subr.mxu0 0.0
    %740 = vmatpush1.msra.mxu0 %v706
    %741 = vmatprep.subr.mxu0 0.0
    %742 = vmatpush1.msra.mxu0 %v705
    %743 = vmatprep.subr.mxu0 0.0
    %744 = vmatpush1.msra.mxu0 %v704
    %745 = vmatprep.subr.mxu0 0.0
    %746 = vmatpush1.msra.mxu0 %v703
    %747 = vmatprep.subr.mxu0 0.0
    %748 = vmatpush1.msra.mxu0 %v702
    %749 = vmatprep.subr.mxu0 0.0
    %750 = vmatpush2.msra.mxu0 0.0
    %751 = vmatprep.subr.mxu0 0.0
    %752 = vmatpush2.msra.mxu0 0.0
    %753 = vmatprep.subr.mxu0 0.0
    %754 = vmatpush2.msra.mxu0 0.0
    %755 = vmatprep.subr.mxu0 0.0
    %756 = vmatpush2.msra.mxu0 0.0
    %757 = vmatprep.subr.mxu0 0.0
    %758 = vmatpush2.msra.mxu0 0.0
    %759 = vmatprep.subr.mxu0 0.0
    %760 = vmatpush2.msra.mxu0 0.0
    %761 = vmatprep.subr.mxu0 0.0
    %762 = vmatpush2.msra.mxu0 0.0
    %763 = vmatprep.subr.mxu0 0.0
    %764 = vmatpush2.msra.mxu0 0.0
    %765 = vmatprep.subr.mxu0 0.0
    %766 = vmatpush2.msra.mxu0 0.0
    %767 = vmatprep.subr.mxu0 0.0
    %768 = vmatpush2.msra.mxu0 0.0
    %769 = vmatprep.subr.mxu0 0.0
    %770 = vmatpush2.msra.mxu0 0.0
    %771 = vmatprep.subr.mxu0 0.0
    %772 = vmatpush2.msra.mxu0 0.0
    %773 = vmatprep.subr.mxu0 0.0
    %774 = vmatpush2.msra.mxu0 0.0
    %775 = vmatprep.subr.mxu0 0.0
    %776 = vmatpush2.msra.mxu0 0.0
    %777 = vmatprep.subr.mxu0 0.0
    %778 = vmatpush2.msra.mxu0 0.0
    %779 = vmatprep.subr.mxu0 0.0
    %780 = vmatpush2.msra.mxu0 0.0
    %781 = vmatprep.mubr.f32.mxu0 0.0
    %782 = vmatmul.mubr.f32.gmra.mxu0 %v712
    %v783 = vpop.f32.mrf.mxu0
    %v784 = vadd.f32 0.0, %v783
    %v785 = vpop.f32.mrf.mxu0
    %786 = vmatprep.mubr.f32.mxu0 0.0
    %787 = vmatmul.mubr.f32.gmra.mxu0 %v715
    %v788 = vpop.f32.mrf.mxu0
    %v789 = vadd.f32 0.0, %v788
    %v790 = vpop.f32.mrf.mxu0
    %791 = vdwg.mxu0
    %796 = vrot.lane.b32.xlu0 %v101, 32
    %v797 = vpop.permute.xlu0 %796
    %798 = vrot.lane.b32.xlu0 %v102, 32
    %v799 = vpop.permute.xlu0 %798
    %800 = vrot.lane.b32.xlu0 %v103, 32
    %v801 = vpop.permute.xlu0 %800
    %802 = vrot.lane.b32.xlu0 %v104, 32
    %v803 = vpop.permute.xlu0 %802
    %808 = vrot.lane.b32.xlu0 %v110, 32
    %v809 = vpop.permute.xlu0 %808
    %v812 = vsel %vm112, %v784, 0
    %v815 = vsel %vm112, %v789, 0
    %817 = vmatprep.subr.mxu0 0.0
    %818 = vmatpush1.msra.mxu0 0.0
    %819 = vmatprep.subr.mxu0 0.0
    %820 = vmatpush1.msra.mxu0 0.0
    %821 = vmatprep.subr.mxu0 0.0
    %822 = vmatpush1.msra.mxu0 0.0
    %823 = vmatprep.subr.mxu0 0.0
    %824 = vmatpush1.msra.mxu0 0.0
    %825 = vmatprep.subr.mxu0 0.0
    %826 = vmatpush1.msra.mxu0 0.0
    %827 = vmatprep.subr.mxu0 0.0
    %828 = vmatpush1.msra.mxu0 0.0
    %829 = vmatprep.subr.mxu0 0.0
    %830 = vmatpush1.msra.mxu0 0.0
    %831 = vmatprep.subr.mxu0 0.0
    %832 = vmatpush1.msra.mxu0 0.0
    %833 = vmatprep.subr.mxu0 0.0
    %834 = vmatpush1.msra.mxu0 0.0
    %835 = vmatprep.subr.mxu0 0.0
    %836 = vmatpush1.msra.mxu0 0.0
    %837 = vmatprep.subr.mxu0 0.0
    %838 = vmatpush1.msra.mxu0 0.0
    %839 = vmatprep.subr.mxu0 0.0
    %840 = vmatpush1.msra.mxu0 0.0
    %841 = vmatprep.subr.mxu0 0.0
    %842 = vmatpush1.msra.mxu0 %v803
    %843 = vmatprep.subr.mxu0 0.0
    %844 = vmatpush1.msra.mxu0 %v801
    %845 = vmatprep.subr.mxu0 0.0
    %846 = vmatpush1.msra.mxu0 %v799
    %847 = vmatprep.subr.mxu0 0.0
    %848 = vmatpush1.msra.mxu0 %v797
    %849 = vmatprep.subr.mxu0 0.0
    %850 = vmatpush2.msra.mxu0 0.0
    %851 = vmatprep.subr.mxu0 0.0
    %852 = vmatpush2.msra.mxu0 0.0
    %853 = vmatprep.subr.mxu0 0.0
    %854 = vmatpush2.msra.mxu0 0.0
    %855 = vmatprep.subr.mxu0 0.0
    %856 = vmatpush2.msra.mxu0 0.0
    %857 = vmatprep.subr.mxu0 0.0
    %858 = vmatpush2.msra.mxu0 0.0
    %859 = vmatprep.subr.mxu0 0.0
    %860 = vmatpush2.msra.mxu0 0.0
    %861 = vmatprep.subr.mxu0 0.0
    %862 = vmatpush2.msra.mxu0 0.0
    %863 = vmatprep.subr.mxu0 0.0
    %864 = vmatpush2.msra.mxu0 0.0
    %865 = vmatprep.subr.mxu0 0.0
    %866 = vmatpush2.msra.mxu0 0.0
    %867 = vmatprep.subr.mxu0 0.0
    %868 = vmatpush2.msra.mxu0 0.0
    %869 = vmatprep.subr.mxu0 0.0
    %870 = vmatpush2.msra.mxu0 0.0
    %871 = vmatprep.subr.mxu0 0.0
    %872 = vmatpush2.msra.mxu0 0.0
    %873 = vmatprep.subr.mxu0 0.0
    %874 = vmatpush2.msra.mxu0 0.0
    %875 = vmatprep.subr.mxu0 0.0
    %876 = vmatpush2.msra.mxu0 0.0
    %877 = vmatprep.subr.mxu0 0.0
    %878 = vmatpush2.msra.mxu0 0.0
    %879 = vmatprep.subr.mxu0 0.0
    %880 = vmatpush2.msra.mxu0 0.0
    %881 = vmatprep.mubr.f32.mxu0 0.0
    %882 = vmatmul.mubr.f32.gmra.mxu0 %v812
    %v883 = vpop.f32.mrf.mxu0
    %v884 = vadd.f32 %v809, %v883
    %v885 = vpop.f32.mrf.mxu0
    %886 = vmatprep.mubr.f32.mxu0 0.0
    %887 = vmatmul.mubr.f32.gmra.mxu0 %v815
    %v888 = vpop.f32.mrf.mxu0
    %v889 = vadd.f32 %v809, %v888
    %v890 = vpop.f32.mrf.mxu0
    %891 = vdwg.mxu0
    %v892 = vadd.f32 %v73, %v884
    %v893 = vadd.f32 %v74, %v889
    %v894 = vld [vmem:[#allocation7 + $0x1] sm:$0x1]
    %v895 = vsel %vm112, %v892, 0.0
    %896 = vadd.xlane.f32.xlu0 %v895
    %v897 = vpop.xlane.xlu0 %896
    %v898 = vsel %vm112, %v893, 0.0
    %899 = vadd.xlane.f32.xlu0 %v898
    %v900 = vpop.xlane.xlu0 %899
    %v901 = vrcp.pop 32.0
    %v902 = vmul.f32 %v897, %v901
    %v903 = vmul.f32 %v900, %v901
    %v904 = vsub.f32 %v892, %v902
    %v905 = vsub.f32 %v893, %v903
    %v906 = vmul.f32 %v904, %v904
    %v907 = vmul.f32 %v905, %v905
    %v908 = vsel %vm112, %v906, 0.0
    %909 = vadd.xlane.f32.xlu0 %v908
    %v910 = vpop.xlane.xlu0 %909
    %v911 = vsel %vm112, %v907, 0.0
    %912 = vadd.xlane.f32.xlu0 %v911
    %v913 = vpop.xlane.xlu0 %912
    %v914 = vmul.f32 %v910, %v901
    %v915 = vmul.f32 %v913, %v901
    %v916 = vadd.f32 %v914, 1e-05
    %v917 = vadd.f32 %v915, 1e-05
    %v918 = vrsqrt.pop %v916
    %v919 = vrsqrt.pop %v917
    %v920 = vmul.f32 %v904, %v918
    %v921 = vmul.f32 %v905, %v919
    %v923 = vlaneseq
    %v924 = vshrl.u32 %v923, 7
    %v925 = vsub.s32 0, %v924
    %v926 = vrot.slane %v894, %v925
    %v928 = vmul.f32 %v920, %v926
    %v929 = vmul.f32 %v921, %v926
    %930 = vrot.lane.b32.xlu0 %v926, 96
    %v931 = vpop.permute.xlu0 %930
    %v933 = vadd.f32 %v928, %v931
    %v934 = vadd.f32 %v929, %v931
    %v935 = vld [vmem:[#allocation5 + $0x8] sm:$0xff]
    %v936 = vld [vmem:[#allocation5 + $0x28] sm:$0xff]
    %v937 = vld [vmem:[#allocation5 + $0x48] sm:$0xff]
    %v938 = vld [vmem:[#allocation5 + $0x68] sm:$0xff]
    %v939 = vld [vmem:[#allocation7 + $0x2] sm:$0x1]
    %v941 = vlaneseq
    %v942 = vshrl.u32 %v941, 7
    %v943 = vsub.s32 0, %v942
    %v944 = vrot.slane %v939, %v943
    %v947 = vsel %vm112, %v933, 0
    %v950 = vsel %vm112, %v934, 0
    %952 = vmatprep.subr.mxu0 0.0
    %953 = vmatpush1.msra.mxu0 0.0
    %954 = vmatprep.subr.mxu0 0.0
    %955 = vmatpush1.msra.mxu0 0.0
    %956 = vmatprep.subr.mxu0 0.0
    %957 = vmatpush1.msra.mxu0 0.0
    %958 = vmatprep.subr.mxu0 0.0
    %959 = vmatpush1.msra.mxu0 0.0
    %960 = vmatprep.subr.mxu0 0.0
    %961 = vmatpush1.msra.mxu0 0.0
    %962 = vmatprep.subr.mxu0 0.0
    %963 = vmatpush1.msra.mxu0 0.0
    %964 = vmatprep.subr.mxu0 0.0
    %965 = vmatpush1.msra.mxu0 0.0
    %966 = vmatprep.subr.mxu0 0.0
    %967 = vmatpush1.msra.mxu0 0.0
    %968 = vmatprep.subr.mxu0 0.0
    %969 = vmatpush1.msra.mxu0 0.0
    %970 = vmatprep.subr.mxu0 0.0
    %971 = vmatpush1.msra.mxu0 0.0
    %972 = vmatprep.subr.mxu0 0.0
    %973 = vmatpush1.msra.mxu0 0.0
    %974 = vmatprep.subr.mxu0 0.0
    %975 = vmatpush1.msra.mxu0 0.0
    %976 = vmatprep.subr.mxu0 0.0
    %977 = vmatpush1.msra.mxu0 %v938
    %978 = vmatprep.subr.mxu0 0.0
    %979 = vmatpush1.msra.mxu0 %v937
    %980 = vmatprep.subr.mxu0 0.0
    %981 = vmatpush1.msra.mxu0 %v936
    %982 = vmatprep.subr.mxu0 0.0
    %983 = vmatpush1.msra.mxu0 %v935
    %984 = vmatprep.subr.mxu0 0.0
    %985 = vmatpush2.msra.mxu0 0.0
    %986 = vmatprep.subr.mxu0 0.0
    %987 = vmatpush2.msra.mxu0 0.0
    %988 = vmatprep.subr.mxu0 0.0
    %989 = vmatpush2.msra.mxu0 0.0
    %990 = vmatprep.subr.mxu0 0.0
    %991 = vmatpush2.msra.mxu0 0.0
    %992 = vmatprep.subr.mxu0 0.0
    %993 = vmatpush2.msra.mxu0 0.0
    %994 = vmatprep.subr.mxu0 0.0
    %995 = vmatpush2.msra.mxu0 0.0
    %996 = vmatprep.subr.mxu0 0.0
    %997 = vmatpush2.msra.mxu0 0.0
    %998 = vmatprep.subr.mxu0 0.0
    %999 = vmatpush2.msra.mxu0 0.0
    %1000 = vmatprep.subr.mxu0 0.0
    %1001 = vmatpush2.msra.mxu0 0.0
    %1002 = vmatprep.subr.mxu0 0.0
    %1003 = vmatpush2.msra.mxu0 0.0
    %1004 = vmatprep.subr.mxu0 0.0
    %1005 = vmatpush2.msra.mxu0 0.0
    %1006 = vmatprep.subr.mxu0 0.0
    %1007 = vmatpush2.msra.mxu0 0.0
    %1008 = vmatprep.subr.mxu0 0.0
    %1009 = vmatpush2.msra.mxu0 0.0
    %1010 = vmatprep.subr.mxu0 0.0
    %1011 = vmatpush2.msra.mxu0 0.0
    %1012 = vmatprep.subr.mxu0 0.0
    %1013 = vmatpush2.msra.mxu0 0.0
    %1014 = vmatprep.subr.mxu0 0.0
    %1015 = vmatpush2.msra.mxu0 0.0
    %1016 = vmatprep.mubr.f32.mxu0 0.0
    %1017 = vmatmul.mubr.f32.gmra.mxu0 %v947
    %v1018 = vpop.f32.mrf.mxu0
    %v1019 = vadd.f32 %v944, %v1018
    %v1020 = vpop.f32.mrf.mxu0
    %1021 = vmatprep.mubr.f32.mxu0 0.0
    %1022 = vmatmul.mubr.f32.gmra.mxu0 %v950
    %v1023 = vpop.f32.mrf.mxu0
    %v1024 = vadd.f32 %v944, %v1023
    %v1025 = vpop.f32.mrf.mxu0
    %1026 = vdwg.mxu0
    %v1027 = vmul.f32 %v1019, 0.5
    %v1028 = vmul.f32 %v1024, 0.5
    %v1029 = vmul.f32 %v1019, 0.70710677
    %v1030 = vmul.f32 %v1024, 0.70710677
    %v1031 = vand.u32 2147483647, %v1029
    %v1032 = vand.u32 2147483647, %v1030
    %v1033 = vmul.f32 %v1031, 0.3275911
    %v1034 = vmul.f32 %v1032, 0.3275911
    %v1035 = vadd.f32 %v1033, 1.0
    %v1036 = vadd.f32 %v1034, 1.0
    %v1037 = vrcp.pop %v1035
    %v1038 = vmul.f32 1.0, %v1037
    %v1039 = vrcp.pop %v1036
    %v1040 = vmul.f32 1.0, %v1039
    %v1041 = vmul.f32 %v1038, 1.0614054
    %v1042 = vmul.f32 %v1040, 1.0614054
    %v1043 = vadd.f32 %v1041, -1.4531521
    %v1044 = vadd.f32 %v1042, -1.4531521
    %v1045 = vmul.f32 %v1043, %v1038
    %v1046 = vmul.f32 %v1044, %v1040
    %v1047 = vadd.f32 %v1045, 1.4214138
    %v1048 = vadd.f32 %v1046, 1.4214138
    %v1049 = vmul.f32 %v1047, %v1038
    %v1050 = vmul.f32 %v1048, %v1040
    %v1051 = vadd.f32 %v1049, -0.28449672
    %v1052 = vadd.f32 %v1050, -0.28449672
    %v1053 = vmul.f32 %v1051, %v1038
    %v1054 = vmul.f32 %v1052, %v1040
    %v1055 = vadd.f32 %v1053, 0.2548296
    %v1056 = vadd.f32 %v1054, 0.2548296
    %v1057 = vmul.f32 %v1055, %v1038
    %v1058 = vmul.f32 %v1056, %v1040
    %v1059 = vsub.f32 0.0, %v1031
    %v1060 = vsub.f32 0.0, %v1032
    %v1061 = vmul.f32 %v1059, %v1031
    %v1062 = vmul.f32 %v1060, %v1032
    %v1063 = vmul.f32 %v1061, 1.442695
    %v1064 = vpow.pop %v1063
    %v1065 = vmul.f32 %v1062, 1.442695
    %v1066 = vpow.pop %v1065
    %v1067 = vmul.f32 %v1057, %v1064
    %v1068 = vmul.f32 %v1058, %v1066
    %v1069 = vsub.f32 1.0, %v1067
    %v1070 = vsub.f32 1.0, %v1068
    %vm1071 = vcmp.ge.f32.partialorder %v1029, 0.0
    %vm1072 = vcmp.ge.f32.partialorder %v1030, 0.0
    %v1073 = vsub.f32 0.0, %v1069
    %v1074 = vsub.f32 0.0, %v1070
    %v1075 = vsel %vm1071, %v1069, %v1073
    %v1076 = vsel %vm1072, %v1070, %v1074
    %v1077 = vadd.f32 %v1075, 1.0
    %v1078 = vadd.f32 %v1076, 1.0
    %v1079 = vmul.f32 %v1027, %v1077
    %v1080 = vmul.f32 %v1028, %v1078
    %v1081 = vld [vmem:[#allocation5 + $0x10] sm:$0xff]
    %v1082 = vld [vmem:[#allocation5 + $0x30] sm:$0xff]
    %v1083 = vld [vmem:[#allocation5 + $0x50] sm:$0xff]
    %v1084 = vld [vmem:[#allocation5 + $0x70] sm:$0xff]
    %v1085 = vld [vmem:[#allocation7 + $0x3] sm:$0x1]
    %v1087 = vlaneseq
    %v1088 = vshrl.u32 %v1087, 7
    %v1089 = vsub.s32 0, %v1088
    %v1090 = vrot.slane %v1085, %v1089
    %1092 = vmatprep.subr.mxu0 0.0
    %1093 = vmatpush1.xpose.msra.mxu0 0.0
    %1094 = vmatprep.subr.mxu0 0.0
    %1095 = vmatpush1.xpose.msra.mxu0 0.0
    %1096 = vmatprep.subr.mxu0 0.0
    %1097 = vmatpush1.xpose.msra.mxu0 0.0
    %1098 = vmatprep.subr.mxu0 0.0
    %1099 = vmatpush1.xpose.msra.mxu0 0.0
    %1100 = vmatprep.subr.mxu0 0.0
    %1101 = vmatpush1.xpose.msra.mxu0 0.0
    %1102 = vmatprep.subr.mxu0 0.0
    %1103 = vmatpush1.xpose.msra.mxu0 0.0
    %1104 = vmatprep.subr.mxu0 0.0
    %1105 = vmatpush1.xpose.msra.mxu0 0.0
    %1106 = vmatprep.subr.mxu0 0.0
    %1107 = vmatpush1.xpose.msra.mxu0 0.0
    %1108 = vmatprep.subr.mxu0 0.0
    %1109 = vmatpush1.xpose.msra.mxu0 0.0
    %1110 = vmatprep.subr.mxu0 0.0
    %1111 = vmatpush1.xpose.msra.mxu0 0.0
    %1112 = vmatprep.subr.mxu0 0.0
    %1113 = vmatpush1.xpose.msra.mxu0 0.0
    %1114 = vmatprep.subr.mxu0 0.0
    %1115 = vmatpush1.xpose.msra.mxu0 0.0
    %1116 = vmatprep.subr.mxu0 0.0
    %1117 = vmatpush1.xpose.msra.mxu0 %v1084
    %1118 = vmatprep.subr.mxu0 0.0
    %1119 = vmatpush1.xpose.msra.mxu0 %v1083
    %1120 = vmatprep.subr.mxu0 0.0
    %1121 = vmatpush1.xpose.msra.mxu0 %v1082
    %1122 = vmatprep.subr.mxu0 0.0
    %1123 = vmatpush1.xpose.msra.mxu0 %v1081
    %1124 = vmatprep.subr.mxu0 0.0
    %1125 = vmatpush2.xpose.msra.mxu0 0.0
    %1126 = vmatprep.subr.mxu0 0.0
    %1127 = vmatpush2.xpose.msra.mxu0 0.0
    %1128 = vmatprep.subr.mxu0 0.0
    %1129 = vmatpush2.xpose.msra.mxu0 0.0
    %1130 = vmatprep.subr.mxu0 0.0
    %1131 = vmatpush2.xpose.msra.mxu0 0.0
    %1132 = vmatprep.subr.mxu0 0.0
    %1133 = vmatpush2.xpose.msra.mxu0 0.0
    %1134 = vmatprep.subr.mxu0 0.0
    %1135 = vmatpush2.xpose.msra.mxu0 0.0
    %1136 = vmatprep.subr.mxu0 0.0
    %1137 = vmatpush2.xpose.msra.mxu0 0.0
    %1138 = vmatprep.subr.mxu0 0.0
    %1139 = vmatpush2.xpose.msra.mxu0 0.0
    %1140 = vmatprep.subr.mxu0 0.0
    %1141 = vmatpush2.xpose.msra.mxu0 0.0
    %1142 = vmatprep.subr.mxu0 0.0
    %1143 = vmatpush2.xpose.msra.mxu0 0.0
    %1144 = vmatprep.subr.mxu0 0.0
    %1145 = vmatpush2.xpose.msra.mxu0 0.0
    %1146 = vmatprep.subr.mxu0 0.0
    %1147 = vmatpush2.xpose.msra.mxu0 0.0
    %1148 = vmatprep.subr.mxu0 0.0
    %1149 = vmatpush2.xpose.msra.mxu0 0.0
    %1150 = vmatprep.subr.mxu0 0.0
    %1151 = vmatpush2.xpose.msra.mxu0 0.0
    %1152 = vmatprep.subr.mxu0 0.0
    %1153 = vmatpush2.xpose.msra.mxu0 0.0
    %1154 = vmatprep.subr.mxu0 0.0
    %1155 = vmatpush2.xpose.msra.mxu0 0.0
    %1156 = vmatprep.mubr.f32.mxu0 0.0
    %1157 = vmatmul.mubr.f32.gmra.mxu0 %v1079
    %v1158 = vpop.f32.mrf.mxu0
    %v1159 = vadd.f32 %v1090, %v1158
    %v1160 = vpop.f32.mrf.mxu0
    %1161 = vmatprep.mubr.f32.mxu0 0.0
    %1162 = vmatmul.mubr.f32.gmra.mxu0 %v1080
    %v1163 = vpop.f32.mrf.mxu0
    %v1164 = vadd.f32 %v1090, %v1163
    %v1165 = vpop.f32.mrf.mxu0
    %1166 = vdwg.mxu0
    %v1167 = vadd.f32 %v933, %v1159
    %v1168 = vadd.f32 %v934, %v1164
    %v1169 = vsel %vm112, %v1167, 0.0
    %1170 = vadd.xlane.f32.xlu0 %v1169
    %v1171 = vpop.xlane.xlu0 %1170
    %v1172 = vsel %vm112, %v1168, 0.0
    %1173 = vadd.xlane.f32.xlu0 %v1172
    %v1174 = vpop.xlane.xlu0 %1173
    %v1175 = vmul.f32 %v1171, %v901
    %v1176 = vmul.f32 %v1174, %v901
    %v1177 = vsub.f32 %v1167, %v1175
    %v1178 = vsub.f32 %v1168, %v1176
    %v1179 = vmul.f32 %v1177, %v1177
    %v1180 = vmul.f32 %v1178, %v1178
    %v1181 = vsel %vm112, %v1179, 0.0
    %1182 = vadd.xlane.f32.xlu0 %v1181
    %v1183 = vpop.xlane.xlu0 %1182
    %v1184 = vsel %vm112, %v1180, 0.0
    %1185 = vadd.xlane.f32.xlu0 %v1184
    %v1186 = vpop.xlane.xlu0 %1185
    %v1187 = vmul.f32 %v1183, %v901
    %v1188 = vmul.f32 %v1186, %v901
    %v1189 = vadd.f32 %v1187, 1e-05
    %v1190 = vadd.f32 %v1188, 1e-05
    %v1191 = vrsqrt.pop %v1189
    %v1192 = vrsqrt.pop %v1190
    %v1193 = vmul.f32 %v1177, %v1191
    %v1194 = vmul.f32 %v1178, %v1192
    %1195 = vrot.lane.b32.xlu0 %v926, 64
    %v1196 = vpop.permute.xlu0 %1195
    %v1198 = vmul.f32 %v1193, %v1196
    %v1199 = vmul.f32 %v1194, %v1196
    %1200 = vrot.lane.b32.xlu0 %v926, 32
    %v1201 = vpop.permute.xlu0 %1200
    %v1203 = vadd.f32 %v1198, %v1201
    %v1204 = vadd.f32 %v1199, %v1201
    %v1205 = vld [vmem:[#allocation8 + $0xd0] sm:$0xff]
    %v1206 = vld [vmem:[#allocation8 + $0xd8] sm:$0xff]
    %v1207 = vld [vmem:[#allocation8 + $0xe0] sm:$0xff]
    %v1208 = vld [vmem:[#allocation8 + $0xe8] sm:$0x3]
    %v1209 = vld [vmem:[#allocation8 + $0xf0] sm:$0x3]
    %s1210 = scalar_lea.vmem [#allocation5], 128
    %v1211 = vld [vmem:[%s1210] sm:$0xff]
    %v1212 = vld [vmem:[%s1210 + $0x20] sm:$0xff]
    %v1213 = vld [vmem:[%s1210 + $0x40] sm:$0xff]
    %v1214 = vld [vmem:[%s1210 + $0x60] sm:$0xff]
    %s1215 = scalar_lea.vmem [#allocation7], 4
    %v1216 = vld [vmem:[%s1215] sm:$0x1]
    %v1218 = vlaneseq
    %v1219 = vshrl.u32 %v1218, 7
    %v1220 = vsub.s32 0, %v1219
    %v1221 = vrot.slane %v1216, %v1220
    %v1224 = vsel %vm112, %v1203, 0
    %v1227 = vsel %vm112, %v1204, 0
    %1229 = vmatprep.subr.mxu0 0.0
    %1230 = vmatpush1.msra.mxu0 0.0
    %1231 = vmatprep.subr.mxu0 0.0
    %1232 = vmatpush1.msra.mxu0 0.0
    %1233 = vmatprep.subr.mxu0 0.0
    %1234 = vmatpush1.msra.mxu0 0.0
    %1235 = vmatprep.subr.mxu0 0.0
    %1236 = vmatpush1.msra.mxu0 0.0
    %1237 = vmatprep.subr.mxu0 0.0
    %1238 = vmatpush1.msra.mxu0 0.0
    %1239 = vmatprep.subr.mxu0 0.0
    %1240 = vmatpush1.msra.mxu0 0.0
    %1241 = vmatprep.subr.mxu0 0.0
    %1242 = vmatpush1.msra.mxu0 0.0
    %1243 = vmatprep.subr.mxu0 0.0
    %1244 = vmatpush1.msra.mxu0 0.0
    %1245 = vmatprep.subr.mxu0 0.0
    %1246 = vmatpush1.msra.mxu0 0.0
    %1247 = vmatprep.subr.mxu0 0.0
    %1248 = vmatpush1.msra.mxu0 0.0
    %1249 = vmatprep.subr.mxu0 0.0
    %1250 = vmatpush1.msra.mxu0 0.0
    %1251 = vmatprep.subr.mxu0 0.0
    %1252 = vmatpush1.msra.mxu0 0.0
    %1253 = vmatprep.subr.mxu0 0.0
    %1254 = vmatpush1.msra.mxu0 %v1214
    %1255 = vmatprep.subr.mxu0 0.0
    %1256 = vmatpush1.msra.mxu0 %v1213
    %1257 = vmatprep.subr.mxu0 0.0
    %1258 = vmatpush1.msra.mxu0 %v1212
    %1259 = vmatprep.subr.mxu0 0.0
    %1260 = vmatpush1.msra.mxu0 %v1211
    %1261 = vmatprep.subr.mxu0 0.0
    %1262 = vmatpush2.msra.mxu0 0.0
    %1263 = vmatprep.subr.mxu0 0.0
    %1264 = vmatpush2.msra.mxu0 0.0
    %1265 = vmatprep.subr.mxu0 0.0
    %1266 = vmatpush2.msra.mxu0 0.0
    %1267 = vmatprep.subr.mxu0 0.0
    %1268 = vmatpush2.msra.mxu0 0.0
    %1269 = vmatprep.subr.mxu0 0.0
    %1270 = vmatpush2.msra.mxu0 0.0
    %1271 = vmatprep.subr.mxu0 0.0
    %1272 = vmatpush2.msra.mxu0 0.0
    %1273 = vmatprep.subr.mxu0 0.0
    %1274 = vmatpush2.msra.mxu0 0.0
    %1275 = vmatprep.subr.mxu0 0.0
    %1276 = vmatpush2.msra.mxu0 0.0
    %1277 = vmatprep.subr.mxu0 0.0
    %1278 = vmatpush2.msra.mxu0 0.0
    %1279 = vmatprep.subr.mxu0 0.0
    %1280 = vmatpush2.msra.mxu0 0.0
    %1281 = vmatprep.subr.mxu0 0.0
    %1282 = vmatpush2.msra.mxu0 0.0
    %1283 = vmatprep.subr.mxu0 0.0
    %1284 = vmatpush2.msra.mxu0 0.0
    %1285 = vmatprep.subr.mxu0 0.0
    %1286 = vmatpush2.msra.mxu0 0.0
    %1287 = vmatprep.subr.mxu0 0.0
    %1288 = vmatpush2.msra.mxu0 0.0
    %1289 = vmatprep.subr.mxu0 0.0
    %1290 = vmatpush2.msra.mxu0 0.0
    %1291 = vmatprep.subr.mxu0 0.0
    %1292 = vmatpush2.msra.mxu0 0.0
    %1293 = vmatprep.mubr.f32.mxu0 0.0
    %1294 = vmatmul.mubr.f32.gmra.mxu0 %v1224
    %v1295 = vpop.f32.mrf.mxu0
    %v1296 = vadd.f32 %v1221, %v1295
    %v1297 = vpop.f32.mrf.mxu0
    %1298 = vmatprep.mubr.f32.mxu0 0.0
    %1299 = vmatmul.mubr.f32.gmra.mxu0 %v1227
    %v1300 = vpop.f32.mrf.mxu0
    %v1301 = vadd.f32 %v1221, %v1300
    %v1302 = vpop.f32.mrf.mxu0
    %1303 = vdwg.mxu0
    %v1305 = vsel %vm194, %v1205, 0
    %1307 = vmatprep.subr.mxu0 0.0
    %1308 = vmatpush1.msra.mxu0 0.0
    %1309 = vmatprep.subr.mxu0 0.0
    %1310 = vmatpush1.msra.mxu0 0.0
    %1311 = vmatprep.subr.mxu0 0.0
    %1312 = vmatpush1.msra.mxu0 0.0
    %1313 = vmatprep.subr.mxu0 0.0
    %1314 = vmatpush1.msra.mxu0 0.0
    %1315 = vmatprep.subr.mxu0 0.0
    %1316 = vmatpush1.msra.mxu0 0.0
    %1317 = vmatprep.subr.mxu0 0.0
    %1318 = vmatpush1.msra.mxu0 0.0
    %1319 = vmatprep.subr.mxu0 0.0
    %1320 = vmatpush1.msra.mxu0 0.0
    %1321 = vmatprep.subr.mxu0 0.0
    %1322 = vmatpush1.msra.mxu0 0.0
    %1323 = vmatprep.subr.mxu0 0.0
    %1324 = vmatpush1.msra.mxu0 0.0
    %1325 = vmatprep.subr.mxu0 0.0
    %1326 = vmatpush1.msra.mxu0 0.0
    %1327 = vmatprep.subr.mxu0 0.0
    %1328 = vmatpush1.msra.mxu0 0.0
    %1329 = vmatprep.subr.mxu0 0.0
    %1330 = vmatpush1.msra.mxu0 0.0
    %1331 = vmatprep.subr.mxu0 0.0
    %1332 = vmatpush1.msra.mxu0 0.0
    %1333 = vmatprep.subr.mxu0 0.0
    %1334 = vmatpush1.msra.mxu0 0.0
    %1335 = vmatprep.subr.mxu0 0.0
    %1336 = vmatpush1.msra.mxu0 %v1301
    %1337 = vmatprep.subr.mxu0 0.0
    %1338 = vmatpush1.msra.mxu0 %v1296
    %1339 = vmatprep.subr.mxu0 0.0
    %1340 = vmatpush2.msra.mxu0 0.0
    %1341 = vmatprep.subr.mxu0 0.0
    %1342 = vmatpush2.msra.mxu0 0.0
    %1343 = vmatprep.subr.mxu0 0.0
    %1344 = vmatpush2.msra.mxu0 0.0
    %1345 = vmatprep.subr.mxu0 0.0
    %1346 = vmatpush2.msra.mxu0 0.0
    %1347 = vmatprep.subr.mxu0 0.0
    %1348 = vmatpush2.msra.mxu0 0.0
    %1349 = vmatprep.subr.mxu0 0.0
    %1350 = vmatpush2.msra.mxu0 0.0
    %1351 = vmatprep.subr.mxu0 0.0
    %1352 = vmatpush2.msra.mxu0 0.0
    %1353 = vmatprep.subr.mxu0 0.0
    %1354 = vmatpush2.msra.mxu0 0.0
    %1355 = vmatprep.subr.mxu0 0.0
    %1356 = vmatpush2.msra.mxu0 0.0
    %1357 = vmatprep.subr.mxu0 0.0
    %1358 = vmatpush2.msra.mxu0 0.0
    %1359 = vmatprep.subr.mxu0 0.0
    %1360 = vmatpush2.msra.mxu0 0.0
    %1361 = vmatprep.subr.mxu0 0.0
    %1362 = vmatpush2.msra.mxu0 0.0
    %1363 = vmatprep.subr.mxu0 0.0
    %1364 = vmatpush2.msra.mxu0 0.0
    %1365 = vmatprep.subr.mxu0 0.0
    %1366 = vmatpush2.msra.mxu0 0.0
    %1367 = vmatprep.subr.mxu0 0.0
    %1368 = vmatpush2.msra.mxu0 0.0
    %1369 = vmatprep.subr.mxu0 0.0
    %1370 = vmatpush2.msra.mxu0 0.0
    %1371 = vmatprep.mubr.f32.mxu0 0.0
    %1372 = vmatmul.mubr.f32.gmra.mxu0 %v1305
    %v1373 = vpop.f32.mrf.mxu0
    %v1374 = vadd.f32 0.0, %v1373
    %v1375 = vpop.f32.mrf.mxu0
    %1376 = vdwg.mxu0
    %v1377 = vmul.f32 %v1374, %v1206
    %1380 = vrot.lane.b32.xlu0 %v1296, 96
    %v1381 = vpop.permute.xlu0 %1380
    %1382 = vrot.lane.b32.xlu0 %v1301, 96
    %v1383 = vpop.permute.xlu0 %1382
    %v1385 = vsel %vm112, %v1377, 0
    %v1387 = vsel %vm112, %v1381, 0
    %v1389 = vsel %vm112, %v1383, 0
    %1391 = vmatprep.subr.mxu0 0.0
    %1392 = vmatpush1.xpose.msra.mxu0 0.0
    %1393 = vmatprep.subr.mxu0 0.0
    %1394 = vmatpush1.xpose.msra.mxu0 0.0
    %1395 = vmatprep.subr.mxu0 0.0
    %1396 = vmatpush1.xpose.msra.mxu0 0.0
    %1397 = vmatprep.subr.mxu0 0.0
    %1398 = vmatpush1.xpose.msra.mxu0 0.0
    %1399 = vmatprep.subr.mxu0 0.0
    %1400 = vmatpush1.xpose.msra.mxu0 0.0
    %1401 = vmatprep.subr.mxu0 0.0
    %1402 = vmatpush1.xpose.msra.mxu0 0.0
    %1403 = vmatprep.subr.mxu0 0.0
    %1404 = vmatpush1.xpose.msra.mxu0 0.0
    %1405 = vmatprep.subr.mxu0 0.0
    %1406 = vmatpush1.xpose.msra.mxu0 0.0
    %1407 = vmatprep.subr.mxu0 0.0
    %1408 = vmatpush1.xpose.msra.mxu0 0.0
    %1409 = vmatprep.subr.mxu0 0.0
    %1410 = vmatpush1.xpose.msra.mxu0 0.0
    %1411 = vmatprep.subr.mxu0 0.0
    %1412 = vmatpush1.xpose.msra.mxu0 0.0
    %1413 = vmatprep.subr.mxu0 0.0
    %1414 = vmatpush1.xpose.msra.mxu0 0.0
    %1415 = vmatprep.subr.mxu0 0.0
    %1416 = vmatpush1.xpose.msra.mxu0 0.0
    %1417 = vmatprep.subr.mxu0 0.0
    %1418 = vmatpush1.xpose.msra.mxu0 0.0
    %1419 = vmatprep.subr.mxu0 0.0
    %1420 = vmatpush1.xpose.msra.mxu0 %v1389
    %1421 = vmatprep.subr.mxu0 0.0
    %1422 = vmatpush1.xpose.msra.mxu0 %v1387
    %1423 = vmatprep.subr.mxu0 0.0
    %1424 = vmatpush2.xpose.msra.mxu0 0.0
    %1425 = vmatprep.subr.mxu0 0.0
    %1426 = vmatpush2.xpose.msra.mxu0 0.0
    %1427 = vmatprep.subr.mxu0 0.0
    %1428 = vmatpush2.xpose.msra.mxu0 0.0
    %1429 = vmatprep.subr.mxu0 0.0
    %1430 = vmatpush2.xpose.msra.mxu0 0.0
    %1431 = vmatprep.subr.mxu0 0.0
    %1432 = vmatpush2.xpose.msra.mxu0 0.0
    %1433 = vmatprep.subr.mxu0 0.0
    %1434 = vmatpush2.xpose.msra.mxu0 0.0
    %1435 = vmatprep.subr.mxu0 0.0
    %1436 = vmatpush2.xpose.msra.mxu0 0.0
    %1437 = vmatprep.subr.mxu0 0.0
    %1438 = vmatpush2.xpose.msra.mxu0 0.0
    %1439 = vmatprep.subr.mxu0 0.0
    %1440 = vmatpush2.xpose.msra.mxu0 0.0
    %1441 = vmatprep.subr.mxu0 0.0
    %1442 = vmatpush2.xpose.msra.mxu0 0.0
    %1443 = vmatprep.subr.mxu0 0.0
    %1444 = vmatpush2.xpose.msra.mxu0 0.0
    %1445 = vmatprep.subr.mxu0 0.0
    %1446 = vmatpush2.xpose.msra.mxu0 0.0
    %1447 = vmatprep.subr.mxu0 0.0
    %1448 = vmatpush2.xpose.msra.mxu0 0.0
    %1449 = vmatprep.subr.mxu0 0.0
    %1450 = vmatpush2.xpose.msra.mxu0 0.0
    %1451 = vmatprep.subr.mxu0 0.0
    %1452 = vmatpush2.xpose.msra.mxu0 0.0
    %1453 = vmatprep.subr.mxu0 0.0
    %1454 = vmatpush2.xpose.msra.mxu0 0.0
    %1455 = vmatprep.mubr.f32.mxu0 0.0
    %1456 = vmatmul.mubr.f32.gmra.mxu0 %v1385
    %v1457 = vpop.f32.mrf.mxu0
    %v1458 = vadd.f32 0.0, %v1457
    %v1459 = vpop.f32.mrf.mxu0
    %1460 = vdwg.mxu0
    %v1461 = vsel %vm194, %v1458, -inf
    %1462 = vmax.xlane.f32.xlu0 %v1461
    %v1463 = vpop.xlane.xlu0 %1462
    %v1464 = vsub.f32 %v1458, %v1463
    %v1465 = vmul.f32 %v1464, 1.442695
    %v1466 = vpow.pop %v1465
    %v1467 = vmul.f32 %v1466, %v1207
    %v1468 = vsel %vm194, %v1467, 0.0
    %1469 = vadd.xlane.f32.xlu0 %v1468
    %v1470 = vpop.xlane.xlu0 %1469
    %v1471 = vrcp.pop %v1470
    %v1472 = vmul.f32 %v1467, %v1471
    %1473 = vrot.lane.b32.xlu0 %v1296, 64
    %v1474 = vpop.permute.xlu0 %1473
    %1475 = vrot.lane.b32.xlu0 %v1301, 64
    %v1476 = vpop.permute.xlu0 %1475
    %v1480 = vsel %vm194, %v1472, 0
    %1482 = vmatprep.subr.mxu0 0.0
    %1483 = vmatpush1.msra.mxu0 0.0
    %1484 = vmatprep.subr.mxu0 0.0
    %1485 = vmatpush1.msra.mxu0 0.0
    %1486 = vmatprep.subr.mxu0 0.0
    %1487 = vmatpush1.msra.mxu0 0.0
    %1488 = vmatprep.subr.mxu0 0.0
    %1489 = vmatpush1.msra.mxu0 0.0
    %1490 = vmatprep.subr.mxu0 0.0
    %1491 = vmatpush1.msra.mxu0 0.0
    %1492 = vmatprep.subr.mxu0 0.0
    %1493 = vmatpush1.msra.mxu0 0.0
    %1494 = vmatprep.subr.mxu0 0.0
    %1495 = vmatpush1.msra.mxu0 0.0
    %1496 = vmatprep.subr.mxu0 0.0
    %1497 = vmatpush1.msra.mxu0 0.0
    %1498 = vmatprep.subr.mxu0 0.0
    %1499 = vmatpush1.msra.mxu0 0.0
    %1500 = vmatprep.subr.mxu0 0.0
    %1501 = vmatpush1.msra.mxu0 0.0
    %1502 = vmatprep.subr.mxu0 0.0
    %1503 = vmatpush1.msra.mxu0 0.0
    %1504 = vmatprep.subr.mxu0 0.0
    %1505 = vmatpush1.msra.mxu0 0.0
    %1506 = vmatprep.subr.mxu0 0.0
    %1507 = vmatpush1.msra.mxu0 0.0
    %1508 = vmatprep.subr.mxu0 0.0
    %1509 = vmatpush1.msra.mxu0 0.0
    %1510 = vmatprep.subr.mxu0 0.0
    %1511 = vmatpush1.msra.mxu0 %v1476
    %1512 = vmatprep.subr.mxu0 0.0
    %1513 = vmatpush1.msra.mxu0 %v1474
    %1514 = vmatprep.subr.mxu0 0.0
    %1515 = vmatpush2.msra.mxu0 0.0
    %1516 = vmatprep.subr.mxu0 0.0
    %1517 = vmatpush2.msra.mxu0 0.0
    %1518 = vmatprep.subr.mxu0 0.0
    %1519 = vmatpush2.msra.mxu0 0.0
    %1520 = vmatprep.subr.mxu0 0.0
    %1521 = vmatpush2.msra.mxu0 0.0
    %1522 = vmatprep.subr.mxu0 0.0
    %1523 = vmatpush2.msra.mxu0 0.0
    %1524 = vmatprep.subr.mxu0 0.0
    %1525 = vmatpush2.msra.mxu0 0.0
    %1526 = vmatprep.subr.mxu0 0.0
    %1527 = vmatpush2.msra.mxu0 0.0
    %1528 = vmatprep.subr.mxu0 0.0
    %1529 = vmatpush2.msra.mxu0 0.0
    %1530 = vmatprep.subr.mxu0 0.0
    %1531 = vmatpush2.msra.mxu0 0.0
    %1532 = vmatprep.subr.mxu0 0.0
    %1533 = vmatpush2.msra.mxu0 0.0
    %1534 = vmatprep.subr.mxu0 0.0
    %1535 = vmatpush2.msra.mxu0 0.0
    %1536 = vmatprep.subr.mxu0 0.0
    %1537 = vmatpush2.msra.mxu0 0.0
    %1538 = vmatprep.subr.mxu0 0.0
    %1539 = vmatpush2.msra.mxu0 0.0
    %1540 = vmatprep.subr.mxu0 0.0
    %1541 = vmatpush2.msra.mxu0 0.0
    %1542 = vmatprep.subr.mxu0 0.0
    %1543 = vmatpush2.msra.mxu0 0.0
    %1544 = vmatprep.subr.mxu0 0.0
    %1545 = vmatpush2.msra.mxu0 0.0
    %1546 = vmatprep.mubr.f32.mxu0 0.0
    %1547 = vmatmul.mubr.f32.gmra.mxu0 %v1480
    %v1548 = vpop.f32.mrf.mxu0
    %v1549 = vadd.f32 0.0, %v1548
    %v1550 = vpop.f32.mrf.mxu0
    %1551 = vdwg.mxu0
    %v1552 = vmul.f32 %v1549, %v1206
    %vm1553 = vcmask 64512
    %v1555 = vsel %vm1553, %v1208, 0
    %1557 = vmatprep.subr.mxu0 0.0
    %1558 = vmatpush1.msra.mxu0 0.0
    %1559 = vmatprep.subr.mxu0 0.0
    %1560 = vmatpush1.msra.mxu0 0.0
    %1561 = vmatprep.subr.mxu0 0.0
    %1562 = vmatpush1.msra.mxu0 0.0
    %1563 = vmatprep.subr.mxu0 0.0
    %1564 = vmatpush1.msra.mxu0 0.0
    %1565 = vmatprep.subr.mxu0 0.0
    %1566 = vmatpush1.msra.mxu0 0.0
    %1567 = vmatprep.subr.mxu0 0.0
    %1568 = vmatpush1.msra.mxu0 0.0
    %1569 = vmatprep.subr.mxu0 0.0
    %1570 = vmatpush1.msra.mxu0 0.0
    %1571 = vmatprep.subr.mxu0 0.0
    %1572 = vmatpush1.msra.mxu0 0.0
    %1573 = vmatprep.subr.mxu0 0.0
    %1574 = vmatpush1.msra.mxu0 0.0
    %1575 = vmatprep.subr.mxu0 0.0
    %1576 = vmatpush1.msra.mxu0 0.0
    %1577 = vmatprep.subr.mxu0 0.0
    %1578 = vmatpush1.msra.mxu0 0.0
    %1579 = vmatprep.subr.mxu0 0.0
    %1580 = vmatpush1.msra.mxu0 0.0
    %1581 = vmatprep.subr.mxu0 0.0
    %1582 = vmatpush1.msra.mxu0 0.0
    %1583 = vmatprep.subr.mxu0 0.0
    %1584 = vmatpush1.msra.mxu0 0.0
    %1585 = vmatprep.subr.mxu0 0.0
    %1586 = vmatpush1.msra.mxu0 0.0
    %1587 = vmatprep.subr.mxu0 0.0
    %1588 = vmatpush1.msra.mxu0 %v1552
    %1589 = vmatprep.subr.mxu0 0.0
    %1590 = vmatpush2.msra.mxu0 0.0
    %1591 = vmatprep.subr.mxu0 0.0
    %1592 = vmatpush2.msra.mxu0 0.0
    %1593 = vmatprep.subr.mxu0 0.0
    %1594 = vmatpush2.msra.mxu0 0.0
    %1595 = vmatprep.subr.mxu0 0.0
    %1596 = vmatpush2.msra.mxu0 0.0
    %1597 = vmatprep.subr.mxu0 0.0
    %1598 = vmatpush2.msra.mxu0 0.0
    %1599 = vmatprep.subr.mxu0 0.0
    %1600 = vmatpush2.msra.mxu0 0.0
    %1601 = vmatprep.subr.mxu0 0.0
    %1602 = vmatpush2.msra.mxu0 0.0
    %1603 = vmatprep.subr.mxu0 0.0
    %1604 = vmatpush2.msra.mxu0 0.0
    %1605 = vmatprep.subr.mxu0 0.0
    %1606 = vmatpush2.msra.mxu0 0.0
    %1607 = vmatprep.subr.mxu0 0.0
    %1608 = vmatpush2.msra.mxu0 0.0
    %1609 = vmatprep.subr.mxu0 0.0
    %1610 = vmatpush2.msra.mxu0 0.0
    %1611 = vmatprep.subr.mxu0 0.0
    %1612 = vmatpush2.msra.mxu0 0.0
    %1613 = vmatprep.subr.mxu0 0.0
    %1614 = vmatpush2.msra.mxu0 0.0
    %1615 = vmatprep.subr.mxu0 0.0
    %1616 = vmatpush2.msra.mxu0 0.0
    %1617 = vmatprep.subr.mxu0 0.0
    %1618 = vmatpush2.msra.mxu0 0.0
    %1619 = vmatprep.subr.mxu0 0.0
    %1620 = vmatpush2.msra.mxu0 0.0
    %1621 = vmatprep.mubr.f32.mxu0 0.0
    %1622 = vmatmul.mubr.f32.gmra.mxu0 %v1555
    %v1623 = vpop.f32.mrf.mxu0
    %v1624 = vadd.f32 0.0, %v1623
    %v1625 = vpop.f32.mrf.mxu0
    %1626 = vdwg.mxu0
    %1631 = vrot.lane.b32.xlu0 %v1211, 32
    %v1632 = vpop.permute.xlu0 %1631
    %1633 = vrot.lane.b32.xlu0 %v1212, 32
    %v1634 = vpop.permute.xlu0 %1633
    %1635 = vrot.lane.b32.xlu0 %v1213, 32
    %v1636 = vpop.permute.xlu0 %1635
    %1637 = vrot.lane.b32.xlu0 %v1214, 32
    %v1638 = vpop.permute.xlu0 %1637
    %1643 = vrot.lane.b32.xlu0 %v1221, 32
    %v1644 = vpop.permute.xlu0 %1643
    %v1647 = vsel %vm112, %v1624, 0
    %1649 = vmatprep.subr.mxu0 0.0
    %1650 = vmatpush1.msra.mxu0 0.0
    %1651 = vmatprep.subr.mxu0 0.0
    %1652 = vmatpush1.msra.mxu0 0.0
    %1653 = vmatprep.subr.mxu0 0.0
    %1654 = vmatpush1.msra.mxu0 0.0
    %1655 = vmatprep.subr.mxu0 0.0
    %1656 = vmatpush1.msra.mxu0 0.0
    %1657 = vmatprep.subr.mxu0 0.0
    %1658 = vmatpush1.msra.mxu0 0.0
    %1659 = vmatprep.subr.mxu0 0.0
    %1660 = vmatpush1.msra.mxu0 0.0
    %1661 = vmatprep.subr.mxu0 0.0
    %1662 = vmatpush1.msra.mxu0 0.0
    %1663 = vmatprep.subr.mxu0 0.0
    %1664 = vmatpush1.msra.mxu0 0.0
    %1665 = vmatprep.subr.mxu0 0.0
    %1666 = vmatpush1.msra.mxu0 0.0
    %1667 = vmatprep.subr.mxu0 0.0
    %1668 = vmatpush1.msra.mxu0 0.0
    %1669 = vmatprep.subr.mxu0 0.0
    %1670 = vmatpush1.msra.mxu0 0.0
    %1671 = vmatprep.subr.mxu0 0.0
    %1672 = vmatpush1.msra.mxu0 0.0
    %1673 = vmatprep.subr.mxu0 0.0
    %1674 = vmatpush1.msra.mxu0 %v1638
    %1675 = vmatprep.subr.mxu0 0.0
    %1676 = vmatpush1.msra.mxu0 %v1636
    %1677 = vmatprep.subr.mxu0 0.0
    %1678 = vmatpush1.msra.mxu0 %v1634
    %1679 = vmatprep.subr.mxu0 0.0
    %1680 = vmatpush1.msra.mxu0 %v1632
    %1681 = vmatprep.subr.mxu0 0.0
    %1682 = vmatpush2.msra.mxu0 0.0
    %1683 = vmatprep.subr.mxu0 0.0
    %1684 = vmatpush2.msra.mxu0 0.0
    %1685 = vmatprep.subr.mxu0 0.0
    %1686 = vmatpush2.msra.mxu0 0.0
    %1687 = vmatprep.subr.mxu0 0.0
    %1688 = vmatpush2.msra.mxu0 0.0
    %1689 = vmatprep.subr.mxu0 0.0
    %1690 = vmatpush2.msra.mxu0 0.0
    %1691 = vmatprep.subr.mxu0 0.0
    %1692 = vmatpush2.msra.mxu0 0.0
    %1693 = vmatprep.subr.mxu0 0.0
    %1694 = vmatpush2.msra.mxu0 0.0
    %1695 = vmatprep.subr.mxu0 0.0
    %1696 = vmatpush2.msra.mxu0 0.0
    %1697 = vmatprep.subr.mxu0 0.0
    %1698 = vmatpush2.msra.mxu0 0.0
    %1699 = vmatprep.subr.mxu0 0.0
    %1700 = vmatpush2.msra.mxu0 0.0
    %1701 = vmatprep.subr.mxu0 0.0
    %1702 = vmatpush2.msra.mxu0 0.0
    %1703 = vmatprep.subr.mxu0 0.0
    %1704 = vmatpush2.msra.mxu0 0.0
    %1705 = vmatprep.subr.mxu0 0.0
    %1706 = vmatpush2.msra.mxu0 0.0
    %1707 = vmatprep.subr.mxu0 0.0
    %1708 = vmatpush2.msra.mxu0 0.0
    %1709 = vmatprep.subr.mxu0 0.0
    %1710 = vmatpush2.msra.mxu0 0.0
    %1711 = vmatprep.subr.mxu0 0.0
    %1712 = vmatpush2.msra.mxu0 0.0
    %1713 = vmatprep.mubr.f32.mxu0 0.0
    %1714 = vmatmul.mubr.f32.gmra.mxu0 %v1647
    %v1715 = vpop.f32.mrf.mxu0
    %v1716 = vadd.f32 %v1644, %v1715
    %v1717 = vpop.f32.mrf.mxu0
    %1718 = vdwg.mxu0
    %v1720 = vsel %vm194, %v1209, 0
    %1722 = vmatprep.subr.mxu0 0.0
    %1723 = vmatpush1.msra.mxu0 0.0
    %1724 = vmatprep.subr.mxu0 0.0
    %1725 = vmatpush1.msra.mxu0 0.0
    %1726 = vmatprep.subr.mxu0 0.0
    %1727 = vmatpush1.msra.mxu0 0.0
    %1728 = vmatprep.subr.mxu0 0.0
    %1729 = vmatpush1.msra.mxu0 0.0
    %1730 = vmatprep.subr.mxu0 0.0
    %1731 = vmatpush1.msra.mxu0 0.0
    %1732 = vmatprep.subr.mxu0 0.0
    %1733 = vmatpush1.msra.mxu0 0.0
    %1734 = vmatprep.subr.mxu0 0.0
    %1735 = vmatpush1.msra.mxu0 0.0
    %1736 = vmatprep.subr.mxu0 0.0
    %1737 = vmatpush1.msra.mxu0 0.0
    %1738 = vmatprep.subr.mxu0 0.0
    %1739 = vmatpush1.msra.mxu0 0.0
    %1740 = vmatprep.subr.mxu0 0.0
    %1741 = vmatpush1.msra.mxu0 0.0
    %1742 = vmatprep.subr.mxu0 0.0
    %1743 = vmatpush1.msra.mxu0 0.0
    %1744 = vmatprep.subr.mxu0 0.0
    %1745 = vmatpush1.msra.mxu0 0.0
    %1746 = vmatprep.subr.mxu0 0.0
    %1747 = vmatpush1.msra.mxu0 0.0
    %1748 = vmatprep.subr.mxu0 0.0
    %1749 = vmatpush1.msra.mxu0 0.0
    %1750 = vmatprep.subr.mxu0 0.0
    %1751 = vmatpush1.msra.mxu0 %v1204
    %1752 = vmatprep.subr.mxu0 0.0
    %1753 = vmatpush1.msra.mxu0 %v1203
    %1754 = vmatprep.subr.mxu0 0.0
    %1755 = vmatpush2.msra.mxu0 0.0
    %1756 = vmatprep.subr.mxu0 0.0
    %1757 = vmatpush2.msra.mxu0 0.0
    %1758 = vmatprep.subr.mxu0 0.0
    %1759 = vmatpush2.msra.mxu0 0.0
    %1760 = vmatprep.subr.mxu0 0.0
    %1761 = vmatpush2.msra.mxu0 0.0
    %1762 = vmatprep.subr.mxu0 0.0
    %1763 = vmatpush2.msra.mxu0 0.0
    %1764 = vmatprep.subr.mxu0 0.0
    %1765 = vmatpush2.msra.mxu0 0.0
    %1766 = vmatprep.subr.mxu0 0.0
    %1767 = vmatpush2.msra.mxu0 0.0
    %1768 = vmatprep.subr.mxu0 0.0
    %1769 = vmatpush2.msra.mxu0 0.0
    %1770 = vmatprep.subr.mxu0 0.0
    %1771 = vmatpush2.msra.mxu0 0.0
    %1772 = vmatprep.subr.mxu0 0.0
    %1773 = vmatpush2.msra.mxu0 0.0
    %1774 = vmatprep.subr.mxu0 0.0
    %1775 = vmatpush2.msra.mxu0 0.0
    %1776 = vmatprep.subr.mxu0 0.0
    %1777 = vmatpush2.msra.mxu0 0.0
    %1778 = vmatprep.subr.mxu0 0.0
    %1779 = vmatpush2.msra.mxu0 0.0
    %1780 = vmatprep.subr.mxu0 0.0
    %1781 = vmatpush2.msra.mxu0 0.0
    %1782 = vmatprep.subr.mxu0 0.0
    %1783 = vmatpush2.msra.mxu0 0.0
    %1784 = vmatprep.subr.mxu0 0.0
    %1785 = vmatpush2.msra.mxu0 0.0
    %1786 = vmatprep.mubr.f32.mxu0 0.0
    %1787 = vmatmul.mubr.f32.gmra.mxu0 %v1720
    %v1788 = vpop.f32.mrf.mxu0
    %v1789 = vadd.f32 %v1716, %v1788
    %v1790 = vpop.f32.mrf.mxu0
    %1791 = vdwg.mxu0
    %v1792 = vld [vmem:[%s1215 + $0x1] sm:$0x1]
    %vm1793 = vcmask 254976
    %v1794 = vsel %vm1793, %v1789, 0.0
    %1795 = vadd.xlane.f32.xlu0 %v1794
    %v1796 = vpop.xlane.xlu0 %1795
    %v1797 = vmul.f32 %v1796, %v901
    %v1798 = vsub.f32 %v1789, %v1797
    %v1799 = vmul.f32 %v1798, %v1798
    %v1800 = vsel %vm1793, %v1799, 0.0
    %1801 = vadd.xlane.f32.xlu0 %v1800
    %v1802 = vpop.xlane.xlu0 %1801
    %v1803 = vmul.f32 %v1802, %v901
    %v1804 = vadd.f32 %v1803, 1e-05
    %v1805 = vrsqrt.pop %v1804
    %v1806 = vmul.f32 %v1798, %v1805
    %v1808 = vlaneseq
    %v1809 = vshrl.u32 %v1808, 7
    %v1810 = vsub.s32 0, %v1809
    %v1811 = vrot.slane %v1792, %v1810
    %v1813 = vmul.f32 %v1806, %v1811
    %1814 = vrot.lane.b32.xlu0 %v1811, 96
    %v1815 = vpop.permute.xlu0 %1814
    %v1817 = vadd.f32 %v1813, %v1815
    %v1818 = vld [vmem:[%s1210 + $0x8] sm:$0xff]
    %v1819 = vld [vmem:[%s1210 + $0x28] sm:$0xff]
    %v1820 = vld [vmem:[%s1210 + $0x48] sm:$0xff]
    %v1821 = vld [vmem:[%s1210 + $0x68] sm:$0xff]
    %v1822 = vld [vmem:[%s1215 + $0x2] sm:$0x1]
    %v1824 = vlaneseq
    %v1825 = vshrl.u32 %v1824, 7
    %v1826 = vsub.s32 0, %v1825
    %v1827 = vrot.slane %v1822, %v1826
    %v1830 = vsel %vm112, %v1817, 0
    %1832 = vmatprep.subr.mxu0 0.0
    %1833 = vmatpush1.msra.mxu0 0.0
    %1834 = vmatprep.subr.mxu0 0.0
    %1835 = vmatpush1.msra.mxu0 0.0
    %1836 = vmatprep.subr.mxu0 0.0
    %1837 = vmatpush1.msra.mxu0 0.0
    %1838 = vmatprep.subr.mxu0 0.0
    %1839 = vmatpush1.msra.mxu0 0.0
    %1840 = vmatprep.subr.mxu0 0.0
    %1841 = vmatpush1.msra.mxu0 0.0
    %1842 = vmatprep.subr.mxu0 0.0
    %1843 = vmatpush1.msra.mxu0 0.0
    %1844 = vmatprep.subr.mxu0 0.0
    %1845 = vmatpush1.msra.mxu0 0.0
    %1846 = vmatprep.subr.mxu0 0.0
    %1847 = vmatpush1.msra.mxu0 0.0
    %1848 = vmatprep.subr.mxu0 0.0
    %1849 = vmatpush1.msra.mxu0 0.0
    %1850 = vmatprep.subr.mxu0 0.0
    %1851 = vmatpush1.msra.mxu0 0.0
    %1852 = vmatprep.subr.mxu0 0.0
    %1853 = vmatpush1.msra.mxu0 0.0
    %1854 = vmatprep.subr.mxu0 0.0
    %1855 = vmatpush1.msra.mxu0 0.0
    %1856 = vmatprep.subr.mxu0 0.0
    %1857 = vmatpush1.msra.mxu0 %v1821
    %1858 = vmatprep.subr.mxu0 0.0
    %1859 = vmatpush1.msra.mxu0 %v1820
    %1860 = vmatprep.subr.mxu0 0.0
    %1861 = vmatpush1.msra.mxu0 %v1819
    %1862 = vmatprep.subr.mxu0 0.0
    %1863 = vmatpush1.msra.mxu0 %v1818
    %1864 = vmatprep.subr.mxu0 0.0
    %1865 = vmatpush2.msra.mxu0 0.0
    %1866 = vmatprep.subr.mxu0 0.0
    %1867 = vmatpush2.msra.mxu0 0.0
    %1868 = vmatprep.subr.mxu0 0.0
    %1869 = vmatpush2.msra.mxu0 0.0
    %1870 = vmatprep.subr.mxu0 0.0
    %1871 = vmatpush2.msra.mxu0 0.0
    %1872 = vmatprep.subr.mxu0 0.0
    %1873 = vmatpush2.msra.mxu0 0.0
    %1874 = vmatprep.subr.mxu0 0.0
    %1875 = vmatpush2.msra.mxu0 0.0
    %1876 = vmatprep.subr.mxu0 0.0
    %1877 = vmatpush2.msra.mxu0 0.0
    %1878 = vmatprep.subr.mxu0 0.0
    %1879 = vmatpush2.msra.mxu0 0.0
    %1880 = vmatprep.subr.mxu0 0.0
    %1881 = vmatpush2.msra.mxu0 0.0
    %1882 = vmatprep.subr.mxu0 0.0
    %1883 = vmatpush2.msra.mxu0 0.0
    %1884 = vmatprep.subr.mxu0 0.0
    %1885 = vmatpush2.msra.mxu0 0.0
    %1886 = vmatprep.subr.mxu0 0.0
    %1887 = vmatpush2.msra.mxu0 0.0
    %1888 = vmatprep.subr.mxu0 0.0
    %1889 = vmatpush2.msra.mxu0 0.0
    %1890 = vmatprep.subr.mxu0 0.0
    %1891 = vmatpush2.msra.mxu0 0.0
    %1892 = vmatprep.subr.mxu0 0.0
    %1893 = vmatpush2.msra.mxu0 0.0
    %1894 = vmatprep.subr.mxu0 0.0
    %1895 = vmatpush2.msra.mxu0 0.0
    %1896 = vmatprep.mubr.f32.mxu0 0.0
    %1897 = vmatmul.mubr.f32.gmra.mxu0 %v1830
    %v1898 = vpop.f32.mrf.mxu0
    %v1899 = vadd.f32 %v1827, %v1898
    %v1900 = vpop.f32.mrf.mxu0
    %1901 = vdwg.mxu0
    %v1902 = vmul.f32 %v1899, 0.5
    %v1903 = vmul.f32 %v1899, 0.70710677
    %v1904 = vand.u32 2147483647, %v1903
    %v1905 = vmul.f32 %v1904, 0.3275911
    %v1906 = vadd.f32 %v1905, 1.0
    %v1907 = vrcp.pop %v1906
    %v1908 = vmul.f32 1.0, %v1907
    %v1909 = vmul.f32 %v1908, 1.0614054
    %v1910 = vadd.f32 %v1909, -1.4531521
    %v1911 = vmul.f32 %v1910, %v1908
    %v1912 = vadd.f32 %v1911, 1.4214138
    %v1913 = vmul.f32 %v1912, %v1908
    %v1914 = vadd.f32 %v1913, -0.28449672
    %v1915 = vmul.f32 %v1914, %v1908
    %v1916 = vadd.f32 %v1915, 0.2548296
    %v1917 = vmul.f32 %v1916, %v1908
    %v1918 = vsub.f32 0.0, %v1904
    %v1919 = vmul.f32 %v1918, %v1904
    %v1920 = vmul.f32 %v1919, 1.442695
    %v1921 = vpow.pop %v1920
    %v1922 = vmul.f32 %v1917, %v1921
    %v1923 = vsub.f32 1.0, %v1922
    %vm1924 = vcmp.ge.f32.partialorder %v1903, 0.0
    %v1925 = vsub.f32 0.0, %v1923
    %v1926 = vsel %vm1924, %v1923, %v1925
    %v1927 = vadd.f32 %v1926, 1.0
    %v1928 = vmul.f32 %v1902, %v1927
    %v1929 = vld [vmem:[%s1210 + $0x10] sm:$0xff]
    %v1930 = vld [vmem:[%s1210 + $0x30] sm:$0xff]
    %v1931 = vld [vmem:[%s1210 + $0x50] sm:$0xff]
    %v1932 = vld [vmem:[%s1210 + $0x70] sm:$0xff]
    %v1933 = vld [vmem:[%s1215 + $0x3] sm:$0x1]
    %v1935 = vlaneseq
    %v1936 = vshrl.u32 %v1935, 7
    %v1937 = vsub.s32 0, %v1936
    %v1938 = vrot.slane %v1933, %v1937
    %1940 = vmatprep.subr.mxu0 0.0
    %1941 = vmatpush1.xpose.msra.mxu0 0.0
    %1942 = vmatprep.subr.mxu0 0.0
    %1943 = vmatpush1.xpose.msra.mxu0 0.0
    %1944 = vmatprep.subr.mxu0 0.0
    %1945 = vmatpush1.xpose.msra.mxu0 0.0
    %1946 = vmatprep.subr.mxu0 0.0
    %1947 = vmatpush1.xpose.msra.mxu0 0.0
    %1948 = vmatprep.subr.mxu0 0.0
    %1949 = vmatpush1.xpose.msra.mxu0 0.0
    %1950 = vmatprep.subr.mxu0 0.0
    %1951 = vmatpush1.xpose.msra.mxu0 0.0
    %1952 = vmatprep.subr.mxu0 0.0
    %1953 = vmatpush1.xpose.msra.mxu0 0.0
    %1954 = vmatprep.subr.mxu0 0.0
    %1955 = vmatpush1.xpose.msra.mxu0 0.0
    %1956 = vmatprep.subr.mxu0 0.0
    %1957 = vmatpush1.xpose.msra.mxu0 0.0
    %1958 = vmatprep.subr.mxu0 0.0
    %1959 = vmatpush1.xpose.msra.mxu0 0.0
    %1960 = vmatprep.subr.mxu0 0.0
    %1961 = vmatpush1.xpose.msra.mxu0 0.0
    %1962 = vmatprep.subr.mxu0 0.0
    %1963 = vmatpush1.xpose.msra.mxu0 0.0
    %1964 = vmatprep.subr.mxu0 0.0
    %1965 = vmatpush1.xpose.msra.mxu0 %v1932
    %1966 = vmatprep.subr.mxu0 0.0
    %1967 = vmatpush1.xpose.msra.mxu0 %v1931
    %1968 = vmatprep.subr.mxu0 0.0
    %1969 = vmatpush1.xpose.msra.mxu0 %v1930
    %1970 = vmatprep.subr.mxu0 0.0
    %1971 = vmatpush1.xpose.msra.mxu0 %v1929
    %1972 = vmatprep.subr.mxu0 0.0
    %1973 = vmatpush2.xpose.msra.mxu0 0.0
    %1974 = vmatprep.subr.mxu0 0.0
    %1975 = vmatpush2.xpose.msra.mxu0 0.0
    %1976 = vmatprep.subr.mxu0 0.0
    %1977 = vmatpush2.xpose.msra.mxu0 0.0
    %1978 = vmatprep.subr.mxu0 0.0
    %1979 = vmatpush2.xpose.msra.mxu0 0.0
    %1980 = vmatprep.subr.mxu0 0.0
    %1981 = vmatpush2.xpose.msra.mxu0 0.0
    %1982 = vmatprep.subr.mxu0 0.0
    %1983 = vmatpush2.xpose.msra.mxu0 0.0
    %1984 = vmatprep.subr.mxu0 0.0
    %1985 = vmatpush2.xpose.msra.mxu0 0.0
    %1986 = vmatprep.subr.mxu0 0.0
    %1987 = vmatpush2.xpose.msra.mxu0 0.0
    %1988 = vmatprep.subr.mxu0 0.0
    %1989 = vmatpush2.xpose.msra.mxu0 0.0
    %1990 = vmatprep.subr.mxu0 0.0
    %1991 = vmatpush2.xpose.msra.mxu0 0.0
    %1992 = vmatprep.subr.mxu0 0.0
    %1993 = vmatpush2.xpose.msra.mxu0 0.0
    %1994 = vmatprep.subr.mxu0 0.0
    %1995 = vmatpush2.xpose.msra.mxu0 0.0
    %1996 = vmatprep.subr.mxu0 0.0
    %1997 = vmatpush2.xpose.msra.mxu0 0.0
    %1998 = vmatprep.subr.mxu0 0.0
    %1999 = vmatpush2.xpose.msra.mxu0 0.0
    %2000 = vmatprep.subr.mxu0 0.0
    %2001 = vmatpush2.xpose.msra.mxu0 0.0
    %2002 = vmatprep.subr.mxu0 0.0
    %2003 = vmatpush2.xpose.msra.mxu0 0.0
    %2004 = vmatprep.mubr.f32.mxu0 0.0
    %2005 = vmatmul.mubr.f32.gmra.mxu0 %v1928
    %v2006 = vpop.f32.mrf.mxu0
    %v2007 = vadd.f32 %v1938, %v2006
    %v2008 = vpop.f32.mrf.mxu0
    %2009 = vdwg.mxu0
    %v2010 = vadd.f32 %v1817, %v2007
    %v2011 = vsel %vm1793, %v2010, 0.0
    %2012 = vadd.xlane.f32.xlu0 %v2011
    %v2013 = vpop.xlane.xlu0 %2012
    %v2014 = vmul.f32 %v2013, %v901
    %v2015 = vsub.f32 %v2010, %v2014
    %v2016 = vmul.f32 %v2015, %v2015
    %v2017 = vsel %vm1793, %v2016, 0.0
    %2018 = vadd.xlane.f32.xlu0 %v2017
    %v2019 = vpop.xlane.xlu0 %2018
    %v2020 = vmul.f32 %v2019, %v901
    %v2021 = vadd.f32 %v2020, 1e-05
    %v2022 = vrsqrt.pop %v2021
    %v2023 = vmul.f32 %v2015, %v2022
    %2024 = vrot.lane.b32.xlu0 %v1811, 64
    %v2025 = vpop.permute.xlu0 %2024
    %v2027 = vmul.f32 %v2023, %v2025
    %2028 = vrot.lane.b32.xlu0 %v1811, 32
    %v2029 = vpop.permute.xlu0 %2028
    %v2031 = vadd.f32 %v2027, %v2029
    %v2032 = vld [vmem:[#allocation5 + $0x18] sm:$0xff]
    %v2033 = vld [vmem:[#allocation5 + $0x38] sm:$0xff]
    %v2034 = vld [vmem:[#allocation5 + $0x58] sm:$0xff]
    %v2035 = vld [vmem:[#allocation5 + $0x78] sm:$0xff]
    %2036 = vrot.lane.b32.xlu0 %v1090, 96
    %v2037 = vpop.permute.xlu0 %2036
    %v2040 = vsel %vm112, %v2031, 0
    %2042 = vmatprep.subr.mxu0 0.0
    %2043 = vmatpush1.msra.mxu0 0.0
    %2044 = vmatprep.subr.mxu0 0.0
    %2045 = vmatpush1.msra.mxu0 0.0
    %2046 = vmatprep.subr.mxu0 0.0
    %2047 = vmatpush1.msra.mxu0 0.0
    %2048 = vmatprep.subr.mxu0 0.0
    %2049 = vmatpush1.msra.mxu0 0.0
    %2050 = vmatprep.subr.mxu0 0.0
    %2051 = vmatpush1.msra.mxu0 0.0
    %2052 = vmatprep.subr.mxu0 0.0
    %2053 = vmatpush1.msra.mxu0 0.0
    %2054 = vmatprep.subr.mxu0 0.0
    %2055 = vmatpush1.msra.mxu0 0.0
    %2056 = vmatprep.subr.mxu0 0.0
    %2057 = vmatpush1.msra.mxu0 0.0
    %2058 = vmatprep.subr.mxu0 0.0
    %2059 = vmatpush1.msra.mxu0 0.0
    %2060 = vmatprep.subr.mxu0 0.0
    %2061 = vmatpush1.msra.mxu0 0.0
    %2062 = vmatprep.subr.mxu0 0.0
    %2063 = vmatpush1.msra.mxu0 0.0
    %2064 = vmatprep.subr.mxu0 0.0
    %2065 = vmatpush1.msra.mxu0 0.0
    %2066 = vmatprep.subr.mxu0 0.0
    %2067 = vmatpush1.msra.mxu0 %v2035
    %2068 = vmatprep.subr.mxu0 0.0
    %2069 = vmatpush1.msra.mxu0 %v2034
    %2070 = vmatprep.subr.mxu0 0.0
    %2071 = vmatpush1.msra.mxu0 %v2033
    %2072 = vmatprep.subr.mxu0 0.0
    %2073 = vmatpush1.msra.mxu0 %v2032
    %2074 = vmatprep.subr.mxu0 0.0
    %2075 = vmatpush2.msra.mxu0 0.0
    %2076 = vmatprep.subr.mxu0 0.0
    %2077 = vmatpush2.msra.mxu0 0.0
    %2078 = vmatprep.subr.mxu0 0.0
    %2079 = vmatpush2.msra.mxu0 0.0
    %2080 = vmatprep.subr.mxu0 0.0
    %2081 = vmatpush2.msra.mxu0 0.0
    %2082 = vmatprep.subr.mxu0 0.0
    %2083 = vmatpush2.msra.mxu0 0.0
    %2084 = vmatprep.subr.mxu0 0.0
    %2085 = vmatpush2.msra.mxu0 0.0
    %2086 = vmatprep.subr.mxu0 0.0
    %2087 = vmatpush2.msra.mxu0 0.0
    %2088 = vmatprep.subr.mxu0 0.0
    %2089 = vmatpush2.msra.mxu0 0.0
    %2090 = vmatprep.subr.mxu0 0.0
    %2091 = vmatpush2.msra.mxu0 0.0
    %2092 = vmatprep.subr.mxu0 0.0
    %2093 = vmatpush2.msra.mxu0 0.0
    %2094 = vmatprep.subr.mxu0 0.0
    %2095 = vmatpush2.msra.mxu0 0.0
    %2096 = vmatprep.subr.mxu0 0.0
    %2097 = vmatpush2.msra.mxu0 0.0
    %2098 = vmatprep.subr.mxu0 0.0
    %2099 = vmatpush2.msra.mxu0 0.0
    %2100 = vmatprep.subr.mxu0 0.0
    %2101 = vmatpush2.msra.mxu0 0.0
    %2102 = vmatprep.subr.mxu0 0.0
    %2103 = vmatpush2.msra.mxu0 0.0
    %2104 = vmatprep.subr.mxu0 0.0
    %2105 = vmatpush2.msra.mxu0 0.0
    %2106 = vmatprep.mubr.f32.mxu0 0.0
    %2107 = vmatmul.mubr.f32.gmra.mxu0 %v2040
    %v2108 = vpop.f32.mrf.mxu0
    %v2109 = vadd.f32 %v2037, %v2108
    %v2110 = vpop.f32.mrf.mxu0
    %2111 = vdwg.mxu0
    %vm2112 = vcmask 58368
    %2113 = vst.msk [vmem:[#allocation10] sm:$0x3] %vm2112, %v2109
    // Predicated region
    $region34: #{tpu_custom_call.1} parent=1 // pred_check
      _
    $region35: #{tpu_custom_call.1} parent=1 // pred_check_branch
      %2115 = sbr.rel (0) target = $region37
    $region36: #{tpu_custom_call.1} parent=1 // pred_region
      %s2117 = ssub.s32 32, 32
      %2118 = vsyncadd [#allocation4], %s2117
      %s2120 = sshll.u32 [#allocation10], 4
      %s2121 = int_to_ptr.vmem [resolvable:$true] %s2120
      %2123 = dma.vmem_to_hbm [thread:$0]  %s2121, 32, %s4, [#allocation4]
    $region37: #{tpu_custom_call.1} parent=1 // pred_fallthru
      _
    // Predicated region
    $region38: #{tpu_custom_call.1} parent=1 // pred_check
      _
    $region39: #{tpu_custom_call.1} parent=1 // pred_check_branch
      %2125 = sbr.rel (0) target = $region41
    $region40: #{tpu_custom_call.1} parent=1 // pred_region
      %2126 = dma.done [#allocation4], 32
    $region41: #{tpu_custom_call.1} parent=1 // pred_fallthru
      _
    %2127 = vsyncpa [#allocation3], 1
    %2128 = vsyncpa [#allocation6], 1
    %2129 = vsyncpa [#allocation9], 1
    %2130 = vsyncpa [#allocation4], 1

</llo_original>
